<compile_context>
chip_gen: v7x
topology: tpu7x:2x2x1
jax: 0.10.0
libtpu: 0.0.40
codegen_flags: <defaults>
</compile_context>

<pallas_src>
import jax
import jax.numpy as jnp
from jax import lax
from jax.experimental import pallas as pl
from jax.experimental.pallas import tpu as pltpu

LANE = 128  # TPU vreg lane width


def mlp_kernel(x_ref,
               w1_ref, b1_ref,
               w2_ref, b2_ref,
               w3_ref, b3_ref,
               w4_ref, b4_ref,
               o_ref):
    # x_ref: (6, TB) — batch on lanes.  Weights are pre-folded so every hidden
    # layer is exactly tanh(W' @ t + b'); the output affine 0.5*t + 0.5 is
    # applied once on the (1, TB) result.
    hp = lax.Precision.HIGHEST
    t = jnp.tanh(jnp.dot(w1_ref[...], x_ref[...],
                         preferred_element_type=jnp.float32, precision=hp)
                 + b1_ref[...])
    t = jnp.tanh(jnp.dot(w2_ref[...], t,
                         preferred_element_type=jnp.float32, precision=hp)
                 + b2_ref[...])
    t = jnp.tanh(jnp.dot(w3_ref[...], t,
                         preferred_element_type=jnp.float32, precision=hp)
                 + b3_ref[...])
    t = jnp.tanh(jnp.dot(w4_ref[...], t,
                         preferred_element_type=jnp.float32, precision=hp)
                 + b4_ref[...])
    o_ref[...] = (0.5 * t + 0.5).astype(o_ref.dtype)
    # TODO(synk): on v5e, if profiling shows the serial MXU push->pop chain is
    # binding, replace the 4 tiny dots with VPU broadcast-FMA chains
    # (sublane-broadcast each feature row and accumulate 6-8 FMAs per layer).


def _fold_params(params):
    """Fold sigmoid(x)=0.5*tanh(x/2)+0.5 affines into the (tiny) weights.

    Returns (W_i', b_i') such that, with t_0 = x:
        t_i = tanh(W_i' @ t_{i-1} + b_i'),    i = 1..4
        output = 0.5 * t_4 + 0.5
    is bit-for-bit the same function as the original sigmoid MLP (up to f32
    rounding).  Only the 8x8-sized parameters are touched, never streamed data.
    """
    w1, b1 = params["w1"], params["b1"]
    folded = [(0.5 * w1, 0.5 * b1)]                       # layer 1: tanh(0.5*z1)
    for w, b in ((params["w2"], params["b2"]),
                 (params["w3"], params["b3"]),
                 (params["w4"], params["b4"])):
        # z_i = W (0.5 t + 0.5) + b ;  t_i = tanh(0.5 z_i)
        folded.append((0.25 * w, 0.5 * b + 0.25 * jnp.sum(w, axis=1)))
    # Biases as (out, 1) columns that broadcast along the lane (batch) axis.
    return [(w, b.reshape(-1, 1)) for w, b in folded]


def neural_network_forward(x, params, *, max_tile=32768):
    """x: (B, 6) float32.  params: PyTorch-layout weights (out, in) + biases (out,)."""
    B, in_features = x.shape
    assert in_features == 6

    (w1, b1), (w2, b2), (w3, b3), (w4, b4) = _fold_params(params)

    # Tile selection: pick the step count first (>=2 and even so v7x's two
    # TensorCores both get whole tiles), then derive the tile so padding is
    # bounded by ~128 * n_tiles lanes instead of up to a full tile.
    b128 = pl.cdiv(B, LANE) * LANE
    n_tiles = max(2, pl.cdiv(b128, max_tile))
    n_tiles += n_tiles % 2
    tb = pl.cdiv(pl.cdiv(b128, n_tiles), LANE) * LANE
    b_pad = tb * n_tiles
    # VMEM guardrail (per review): at tb=32768 the per-step footprint is
    # x 768KiB x2 + out 128KiB x2 + a few (8,tb) f32 temporaries (~1MiB each)
    # -> a few MiB, inside every generation's default scoped VMEM.  If max_tile
    # is swept past ~128K, set pltpu.CompilerParams(vmem_limit_bytes=...).

    # Batch-on-lanes layout: single fused transpose+pad (one HBM copy under
    # jit).  TODO(synk): keep x in (6, B) layout upstream to drop this pass.
    x_t = jnp.pad(x.T, ((0, 0), (0, b_pad - B)))

    # Constant block index -> weights/biases stay VMEM-resident across steps.
    def resident(a):
        return pl.BlockSpec(a.shape, lambda i: (0, 0))

    out = pl.pallas_call(
        mlp_kernel,
        out_shape=jax.ShapeDtypeStruct((1, b_pad), jnp.float32),
        grid=(n_tiles,),
        in_specs=[
            pl.BlockSpec((6, tb), lambda i: (0, i)),   # activations: tiled over batch
            resident(w1), resident(b1),
            resident(w2), resident(b2),
            resident(w3), resident(b3),
            resident(w4), resident(b4),
        ],
        out_specs=pl.BlockSpec((1, tb), lambda i: (0, i)),  # lane-dense output store
        compiler_params=pltpu.CompilerParams(
            dimension_semantics=("parallel",)),  # shards batch across v7x's 2 TCs
    )(x_t, w1, b1, w2, b2, w3, b3, w4, b4)

    return out[:, :B].T  # back to (B, 1); padded lanes (sigmoid(bias)) are dropped


def init_params(key):
    """PyTorch-style init: W ~ U(-1/sqrt(fan_in), 1/sqrt(fan_in)), shape (out, in)."""
    dims = [(6, 8), (8, 8), (8, 8), (8, 1)]
    params = {}
    keys = jax.random.split(key, 2 * len(dims))
    for i, (fan_in, fan_out) in enumerate(dims):
        bound = 1.0 / jnp.sqrt(jnp.float32(fan_in))
        w = jax.random.uniform(keys[2 * i], (fan_out, fan_in), jnp.float32,
                               minval=-bound, maxval=bound)
        b = jax.random.uniform(keys[2 * i + 1], (fan_out,), jnp.float32,
                               minval=-bound, maxval=bound)
        params[f"w{i + 1}"] = w
        params[f"b{i + 1}"] = b
    return params


def reference_forward(x, p):
    h = jax.nn.sigmoid(x @ p["w1"].T + p["b1"])
    h = jax.nn.sigmoid(h @ p["w2"].T + p["b2"])
    h = jax.nn.sigmoid(h @ p["w3"].T + p["b3"])
    return jax.nn.sigmoid(h @ p["w4"].T + p["b4"])


if __name__ == "__main__":
    key = jax.random.PRNGKey(0)
    k_x, k_p = jax.random.split(key)

    B = 8  # small test batch (padded to two 128-lane tiles inside the wrapper)
    x = jax.random.normal(k_x, (B, 6), jnp.float32)
    params = init_params(k_p)

    fwd = jax.jit(neural_network_forward)   # lets XLA fuse the transpose+pad
    out = jax.block_until_ready(fwd(x, params))

    ref = reference_forward(x, params)
    assert out.shape == (B, 1), out.shape
    assert jnp.allclose(out, ref, atol=1e-5, rtol=1e-5), (out, ref)

    print("KERNEL_OK")
</pallas_src>

<mosaic_0001>
module attributes {stable_mosaic.version = 11 : i64} {
  func.func @mlp_kernel(%arg0: i32, %arg1: memref<6x128xf32, #tpu.memory_space<vmem>>, %arg2: memref<8x6xf32, #tpu.memory_space<vmem>>, %arg3: memref<8x1xf32, #tpu.memory_space<vmem>>, %arg4: memref<8x8xf32, #tpu.memory_space<vmem>>, %arg5: memref<8x1xf32, #tpu.memory_space<vmem>>, %arg6: memref<8x8xf32, #tpu.memory_space<vmem>>, %arg7: memref<8x1xf32, #tpu.memory_space<vmem>>, %arg8: memref<1x8xf32, #tpu.memory_space<vmem>>, %arg9: memref<1x1xf32, #tpu.memory_space<vmem>>, %arg10: memref<1x128xf32, #tpu.memory_space<vmem>>) attributes {dimension_semantics = [#tpu.dimension_semantics<parallel>], iteration_bounds = array<i64: 2>, scalar_prefetch = 0 : i64, scratch_operands = 0 : i64, tpu.core_type = #tpu.core_type<tc>, window_params = [{transform_indices = @transform_0, window_bounds = array<i64: 6, 128>}, {pipeline_mode = #tpu.pipeline_mode<synchronous>, transform_indices = @transform_1, window_bounds = array<i64: 8, 6>}, {pipeline_mode = #tpu.pipeline_mode<synchronous>, transform_indices = @transform_2, window_bounds = array<i64: 8, 1>}, {pipeline_mode = #tpu.pipeline_mode<synchronous>, transform_indices = @transform_3, window_bounds = array<i64: 8, 8>}, {pipeline_mode = #tpu.pipeline_mode<synchronous>, transform_indices = @transform_4, window_bounds = array<i64: 8, 1>}, {pipeline_mode = #tpu.pipeline_mode<synchronous>, transform_indices = @transform_5, window_bounds = array<i64: 8, 8>}, {pipeline_mode = #tpu.pipeline_mode<synchronous>, transform_indices = @transform_6, window_bounds = array<i64: 8, 1>}, {pipeline_mode = #tpu.pipeline_mode<synchronous>, transform_indices = @transform_7, window_bounds = array<i64: 1, 8>}, {pipeline_mode = #tpu.pipeline_mode<synchronous>, transform_indices = @transform_8, window_bounds = array<i64: 1, 1>}, {transform_indices = @transform_9, window_bounds = array<i64: 1, 128>}]} {
    %c0 = arith.constant 0 : index
    %c0_0 = arith.constant 0 : index
    %0 = vector.load %arg2[%c0, %c0_0] : memref<8x6xf32, #tpu.memory_space<vmem>>, vector<8x6xf32>
    %c0_1 = arith.constant 0 : index
    %c0_2 = arith.constant 0 : index
    %1 = vector.load %arg1[%c0_1, %c0_2] : memref<6x128xf32, #tpu.memory_space<vmem>>, vector<6x128xf32>
    %cst = arith.constant dense<0.000000e+00> : vector<8x128xf32>
    %2 = tpu.matmul %0, %1, %cst {dimension_numbers = #tpu.dot_dimension_numbers<[1], [0], [0], [1], [0, 0, 1, 1], [], []>, precision = #tpu.contract_precision<fp32>} : vector<8x6xf32>, vector<6x128xf32>, vector<8x128xf32> -> vector<8x128xf32>
    %c0_3 = arith.constant 0 : index
    %c0_4 = arith.constant 0 : index
    %3 = vector.load %arg3[%c0_3, %c0_4] : memref<8x1xf32, #tpu.memory_space<vmem>>, vector<8x1xf32>
    %4 = vector.broadcast %3 : vector<8x1xf32> to vector<8x128xf32>
    %5 = arith.addf %2, %4 : vector<8x128xf32>
    %6 = math.tanh %5 : vector<8x128xf32>
    %c0_5 = arith.constant 0 : index
    %c0_6 = arith.constant 0 : index
    %7 = vector.load %arg4[%c0_5, %c0_6] : memref<8x8xf32, #tpu.memory_space<vmem>>, vector<8x8xf32>
    %cst_7 = arith.constant dense<0.000000e+00> : vector<8x128xf32>
    %8 = tpu.matmul %7, %6, %cst_7 {dimension_numbers = #tpu.dot_dimension_numbers<[1], [0], [0], [1], [0, 0, 1, 1], [], []>, precision = #tpu.contract_precision<fp32>} : vector<8x8xf32>, vector<8x128xf32>, vector<8x128xf32> -> vector<8x128xf32>
    %c0_8 = arith.constant 0 : index
    %c0_9 = arith.constant 0 : index
    %9 = vector.load %arg5[%c0_8, %c0_9] : memref<8x1xf32, #tpu.memory_space<vmem>>, vector<8x1xf32>
    %10 = vector.broadcast %9 : vector<8x1xf32> to vector<8x128xf32>
    %11 = arith.addf %8, %10 : vector<8x128xf32>
    %12 = math.tanh %11 : vector<8x128xf32>
    %c0_10 = arith.constant 0 : index
    %c0_11 = arith.constant 0 : index
    %13 = vector.load %arg6[%c0_10, %c0_11] : memref<8x8xf32, #tpu.memory_space<vmem>>, vector<8x8xf32>
    %cst_12 = arith.constant dense<0.000000e+00> : vector<8x128xf32>
    %14 = tpu.matmul %13, %12, %cst_12 {dimension_numbers = #tpu.dot_dimension_numbers<[1], [0], [0], [1], [0, 0, 1, 1], [], []>, precision = #tpu.contract_precision<fp32>} : vector<8x8xf32>, vector<8x128xf32>, vector<8x128xf32> -> vector<8x128xf32>
    %c0_13 = arith.constant 0 : index
    %c0_14 = arith.constant 0 : index
    %15 = vector.load %arg7[%c0_13, %c0_14] : memref<8x1xf32, #tpu.memory_space<vmem>>, vector<8x1xf32>
    %16 = vector.broadcast %15 : vector<8x1xf32> to vector<8x128xf32>
    %17 = arith.addf %14, %16 : vector<8x128xf32>
    %18 = math.tanh %17 : vector<8x128xf32>
    %c0_15 = arith.constant 0 : index
    %c0_16 = arith.constant 0 : index
    %19 = vector.load %arg8[%c0_15, %c0_16] : memref<1x8xf32, #tpu.memory_space<vmem>>, vector<1x8xf32>
    %cst_17 = arith.constant dense<0.000000e+00> : vector<1x128xf32>
    %20 = tpu.matmul %19, %18, %cst_17 {dimension_numbers = #tpu.dot_dimension_numbers<[1], [0], [0], [1], [0, 0, 1, 1], [], []>, precision = #tpu.contract_precision<fp32>} : vector<1x8xf32>, vector<8x128xf32>, vector<1x128xf32> -> vector<1x128xf32>
    %c0_18 = arith.constant 0 : index
    %c0_19 = arith.constant 0 : index
    %21 = vector.load %arg9[%c0_18, %c0_19] : memref<1x1xf32, #tpu.memory_space<vmem>>, vector<1x1xf32>
    %22 = vector.broadcast %21 : vector<1x1xf32> to vector<1x128xf32>
    %23 = arith.addf %20, %22 : vector<1x128xf32>
    %24 = math.tanh %23 : vector<1x128xf32>
    %cst_20 = arith.constant 5.000000e-01 : f32
    %25 = vector.broadcast %cst_20 : f32 to vector<1x128xf32>
    %26 = arith.mulf %25, %24 : vector<1x128xf32>
    %cst_21 = arith.constant 5.000000e-01 : f32
    %27 = vector.broadcast %cst_21 : f32 to vector<1x128xf32>
    %28 = arith.addf %26, %27 : vector<1x128xf32>
    %c0_22 = arith.constant 0 : index
    %c0_23 = arith.constant 0 : index
    %29 = vector.load %arg10[%c0_22, %c0_23] : memref<1x128xf32, #tpu.memory_space<vmem>>, vector<1x128xf32>
    tpu.vector_store %arg10[%c0_22, %c0_23], %28 {strides = array<i32>} : memref<1x128xf32, #tpu.memory_space<vmem>>, vector<1x128xf32>,
    return
  }
  func.func @transform_0(%arg0: i32) -> (i32, i32) {
    %c0_i32 = arith.constant 0 : i32
    %c0_i32_0 = arith.constant 0 : i32
    return %c0_i32, %arg0 : i32, i32
  }
  func.func @transform_1(%arg0: i32) -> (i32, i32) {
    %c0_i32 = arith.constant 0 : i32
    %c0_i32_0 = arith.constant 0 : i32
    %c0_i32_1 = arith.constant 0 : i32
    return %c0_i32, %c0_i32_0 : i32, i32
  }
  func.func @transform_2(%arg0: i32) -> (i32, i32) {
    %c0_i32 = arith.constant 0 : i32
    %c0_i32_0 = arith.constant 0 : i32
    %c0_i32_1 = arith.constant 0 : i32
    return %c0_i32, %c0_i32_0 : i32, i32
  }
  func.func @transform_3(%arg0: i32) -> (i32, i32) {
    %c0_i32 = arith.constant 0 : i32
    %c0_i32_0 = arith.constant 0 : i32
    %c0_i32_1 = arith.constant 0 : i32
    return %c0_i32, %c0_i32_0 : i32, i32
  }
  func.func @transform_4(%arg0: i32) -> (i32, i32) {
    %c0_i32 = arith.constant 0 : i32
    %c0_i32_0 = arith.constant 0 : i32
    %c0_i32_1 = arith.constant 0 : i32
    return %c0_i32, %c0_i32_0 : i32, i32
  }
  func.func @transform_5(%arg0: i32) -> (i32, i32) {
    %c0_i32 = arith.constant 0 : i32
    %c0_i32_0 = arith.constant 0 : i32
    %c0_i32_1 = arith.constant 0 : i32
    return %c0_i32, %c0_i32_0 : i32, i32
  }
  func.func @transform_6(%arg0: i32) -> (i32, i32) {
    %c0_i32 = arith.constant 0 : i32
    %c0_i32_0 = arith.constant 0 : i32
    %c0_i32_1 = arith.constant 0 : i32
    return %c0_i32, %c0_i32_0 : i32, i32
  }
  func.func @transform_7(%arg0: i32) -> (i32, i32) {
    %c0_i32 = arith.constant 0 : i32
    %c0_i32_0 = arith.constant 0 : i32
    %c0_i32_1 = arith.constant 0 : i32
    return %c0_i32, %c0_i32_0 : i32, i32
  }
  func.func @transform_8(%arg0: i32) -> (i32, i32) {
    %c0_i32 = arith.constant 0 : i32
    %c0_i32_0 = arith.constant 0 : i32
    %c0_i32_1 = arith.constant 0 : i32
    return %c0_i32, %c0_i32_0 : i32, i32
  }
  func.func @transform_9(%arg0: i32) -> (i32, i32) {
    %c0_i32 = arith.constant 0 : i32
    %c0_i32_0 = arith.constant 0 : i32
    return %c0_i32, %arg0 : i32, i32
  }
}

</mosaic_0001>

<llo_original>
// kernel: neural_network_forward.1
$region0: #{neural_network_forward.1}
  #allocation0 [shape = 'u32[]', space=smem, size = 0x4, offset = 0x4, fixed_abs, tag = 'smem constant byte address 0x4 - core index']
  #allocation1 [shape = 'u32[144,128]{1,0:T(1,128)}', space=vmem, size = 0x12000, scoped, tag = 'internal scratch']
  #allocation2 [shape = 'f32[1,1]{1,0:T(1,128)S(1)}', space=vmem, size = 0x200, scoped, tag = 'scoped memory for neural_network_forward.1']
  %s0 = inlined_call_operand.vmem [shape: f32[6,256], index: 0, kind: input, shape index: {}]
  %s1 = inlined_call_operand.vmem [shape: f32[8,6], index: 1, kind: input, shape index: {}]
  %s2 = inlined_call_operand.vmem [shape: f32[8,1], index: 2, kind: input, shape index: {}]
  %s3 = inlined_call_operand.vmem [shape: f32[8,8], index: 3, kind: input, shape index: {}]
  %s4 = inlined_call_operand.vmem [shape: f32[8,1], index: 4, kind: input, shape index: {}]
  %s5 = inlined_call_operand.vmem [shape: f32[8,8], index: 5, kind: input, shape index: {}]
  %s6 = inlined_call_operand.vmem [shape: f32[8,1], index: 6, kind: input, shape index: {}]
  %s7 = inlined_call_operand.vmem [shape: f32[1,8], index: 7, kind: input, shape index: {}]
  %s8 = inlined_call_operand.<no memory space> [shape: f32[1,1], index: 8, kind: input, shape index: {}]
  %s9 = inlined_call_operand.vmem [shape: f32[1,256], index: 9, kind: output, shape index: {}]
  %s10 = sld [smem:[#allocation0]]
  $region69: #{neural_network_forward.1} parent=0
    _
  %s12 = ssub.s32 1, %s10
  %s13 = scalar_select 0, %s12, %s10
  %v14 = vstv %s8
  %15 = vst [vmem:[#allocation2] sm:$0x1] %v14
  loop: start=0, step=1, limit=4
  $region2: #{neural_network_forward.1} parent=0 // loop_pre_header
    _
  $region3: #{neural_network_forward.1} parent=0 // loop_header
    %s17 = sphi 0, %s21
    %p18 = scmp.ge.s32.totalorder %s17, 4
    %s27 = sphi 0, %s29
    %s30 = sphi 0, %s27
    %s31 = sphi 0, %s30
    %s47 = sphi 0, %s31
    %s51 = sphi 0, %s51
    %s53 = sphi 0, %s51
    %s54 = sphi 0, %s53
    %s68 = sphi 0, %s54
    %s72 = sphi 0, %s72
    %s74 = sphi 0, %s72
    %s75 = sphi 0, %s74
    %s89 = sphi 0, %s75
    %s93 = sphi 0, %s93
    %s95 = sphi 0, %s93
    %s96 = sphi 0, %s95
    %s110 = sphi 0, %s96
    %s114 = sphi 0, %s114
    %s116 = sphi 0, %s114
    %s117 = sphi 0, %s116
    %s131 = sphi 0, %s117
    %s135 = sphi 0, %s135
    %s137 = sphi 0, %s135
    %s138 = sphi 0, %s137
    %s152 = sphi 0, %s138
    %s156 = sphi 0, %s156
    %s158 = sphi 0, %s156
    %s159 = sphi 0, %s158
    %s173 = sphi 0, %s159
    %s177 = sphi 0, %s177
    %s179 = sphi 0, %s177
    %s180 = sphi 0, %s179
    %s194 = sphi 0, %s180
    %s198 = sphi 0, %s198
    %s200 = sphi 0, %s198
    %s201 = sphi 0, %s200
    %s215 = sphi 0, %s201
    %s221 = sphi 0, %s223
    %s224 = sphi 0, %s221
    %s225 = sphi 0, %s224
    %s241 = sphi 0, %s225
  $region4: #{neural_network_forward.1} parent=0 // loop_header_branch
    %20 = sbr.rel (%p18) target = $region8
  $region5: #{neural_network_forward.1} parent=0 // loop_body
    %s22 = ssub.s32 %s17, 1
    %s23 = ssub.s32 %s17, 2
    %s24 = sadd.s32 %s17, 1
    %s25 = ssub.s32 %s17, %s24
    %p26 = scmp.eq.s32.totalorder %s25, 0
    %s28 = sadd.s32 %s27, 1
    %s29 = scalar_select %p26, %s27, %s28
    %p32 = pneg %p26
    %p33 = scmp.eq.s32.totalorder %s17, 1
    %p34 = por %p32, %p33
    %p35 = scmp.ne.s32.totalorder %s27, %s30
    %p36 = scmp.eq.s32.totalorder %s17, 0
    %p37 = por %p35, %p36
    %p38 = scmp.ne.s32.totalorder %s27, %s30
    %p39 = scmp.eq.s32.totalorder %s22, 1
    %p40 = por %p38, %p39
    %p41 = scmp.ne.s32.totalorder %s30, %s31
    %p42 = scmp.eq.s32.totalorder %s22, 0
    %p43 = por %p41, %p42
    %p44 = scmp.ne.s32.totalorder %s30, %s31
    %p45 = scmp.eq.s32.totalorder %s23, 1
    %p46 = por %p44, %p45
    %p48 = scmp.ne.s32.totalorder %s31, %s47
    %p49 = scmp.eq.s32.totalorder %s23, 0
    %p50 = por %p48, %p49
    %s52 = sadd.s32 %s51, 1
    %p55 = scmp.eq.s32.totalorder %s17, 1
    %p56 = scmp.ne.s32.totalorder %s51, %s53
    %p57 = scmp.eq.s32.totalorder %s17, 0
    %p58 = por %p56, %p57
    %p59 = scmp.ne.s32.totalorder %s51, %s53
    %p60 = scmp.eq.s32.totalorder %s22, 1
    %p61 = por %p59, %p60
    %p62 = scmp.ne.s32.totalorder %s53, %s54
    %p63 = scmp.eq.s32.totalorder %s22, 0
    %p64 = por %p62, %p63
    %p65 = scmp.ne.s32.totalorder %s53, %s54
    %p66 = scmp.eq.s32.totalorder %s23, 1
    %p67 = por %p65, %p66
    %p69 = scmp.ne.s32.totalorder %s54, %s68
    %p70 = scmp.eq.s32.totalorder %s23, 0
    %p71 = por %p69, %p70
    %s73 = sadd.s32 %s72, 1
    %p76 = scmp.eq.s32.totalorder %s17, 1
    %p77 = scmp.ne.s32.totalorder %s72, %s74
    %p78 = scmp.eq.s32.totalorder %s17, 0
    %p79 = por %p77, %p78
    %p80 = scmp.ne.s32.totalorder %s72, %s74
    %p81 = scmp.eq.s32.totalorder %s22, 1
    %p82 = por %p80, %p81
    %p83 = scmp.ne.s32.totalorder %s74, %s75
    %p84 = scmp.eq.s32.totalorder %s22, 0
    %p85 = por %p83, %p84
    %p86 = scmp.ne.s32.totalorder %s74, %s75
    %p87 = scmp.eq.s32.totalorder %s23, 1
    %p88 = por %p86, %p87
    %p90 = scmp.ne.s32.totalorder %s75, %s89
    %p91 = scmp.eq.s32.totalorder %s23, 0
    %p92 = por %p90, %p91
    %s94 = sadd.s32 %s93, 1
    %p97 = scmp.eq.s32.totalorder %s17, 1
    %p98 = scmp.ne.s32.totalorder %s93, %s95
    %p99 = scmp.eq.s32.totalorder %s17, 0
    %p100 = por %p98, %p99
    %p101 = scmp.ne.s32.totalorder %s93, %s95
    %p102 = scmp.eq.s32.totalorder %s22, 1
    %p103 = por %p101, %p102
    %p104 = scmp.ne.s32.totalorder %s95, %s96
    %p105 = scmp.eq.s32.totalorder %s22, 0
    %p106 = por %p104, %p105
    %p107 = scmp.ne.s32.totalorder %s95, %s96
    %p108 = scmp.eq.s32.totalorder %s23, 1
    %p109 = por %p107, %p108
    %p111 = scmp.ne.s32.totalorder %s96, %s110
    %p112 = scmp.eq.s32.totalorder %s23, 0
    %p113 = por %p111, %p112
    %s115 = sadd.s32 %s114, 1
    %p118 = scmp.eq.s32.totalorder %s17, 1
    %p119 = scmp.ne.s32.totalorder %s114, %s116
    %p120 = scmp.eq.s32.totalorder %s17, 0
    %p121 = por %p119, %p120
    %p122 = scmp.ne.s32.totalorder %s114, %s116
    %p123 = scmp.eq.s32.totalorder %s22, 1
    %p124 = por %p122, %p123
    %p125 = scmp.ne.s32.totalorder %s116, %s117
    %p126 = scmp.eq.s32.totalorder %s22, 0
    %p127 = por %p125, %p126
    %p128 = scmp.ne.s32.totalorder %s116, %s117
    %p129 = scmp.eq.s32.totalorder %s23, 1
    %p130 = por %p128, %p129
    %p132 = scmp.ne.s32.totalorder %s117, %s131
    %p133 = scmp.eq.s32.totalorder %s23, 0
    %p134 = por %p132, %p133
    %s136 = sadd.s32 %s135, 1
    %p139 = scmp.eq.s32.totalorder %s17, 1
    %p140 = scmp.ne.s32.totalorder %s135, %s137
    %p141 = scmp.eq.s32.totalorder %s17, 0
    %p142 = por %p140, %p141
    %p143 = scmp.ne.s32.totalorder %s135, %s137
    %p144 = scmp.eq.s32.totalorder %s22, 1
    %p145 = por %p143, %p144
    %p146 = scmp.ne.s32.totalorder %s137, %s138
    %p147 = scmp.eq.s32.totalorder %s22, 0
    %p148 = por %p146, %p147
    %p149 = scmp.ne.s32.totalorder %s137, %s138
    %p150 = scmp.eq.s32.totalorder %s23, 1
    %p151 = por %p149, %p150
    %p153 = scmp.ne.s32.totalorder %s138, %s152
    %p154 = scmp.eq.s32.totalorder %s23, 0
    %p155 = por %p153, %p154
    %s157 = sadd.s32 %s156, 1
    %p160 = scmp.eq.s32.totalorder %s17, 1
    %p161 = scmp.ne.s32.totalorder %s156, %s158
    %p162 = scmp.eq.s32.totalorder %s17, 0
    %p163 = por %p161, %p162
    %p164 = scmp.ne.s32.totalorder %s156, %s158
    %p165 = scmp.eq.s32.totalorder %s22, 1
    %p166 = por %p164, %p165
    %p167 = scmp.ne.s32.totalorder %s158, %s159
    %p168 = scmp.eq.s32.totalorder %s22, 0
    %p169 = por %p167, %p168
    %p170 = scmp.ne.s32.totalorder %s158, %s159
    %p171 = scmp.eq.s32.totalorder %s23, 1
    %p172 = por %p170, %p171
    %p174 = scmp.ne.s32.totalorder %s159, %s173
    %p175 = scmp.eq.s32.totalorder %s23, 0
    %p176 = por %p174, %p175
    %s178 = sadd.s32 %s177, 1
    %p181 = scmp.eq.s32.totalorder %s17, 1
    %p182 = scmp.ne.s32.totalorder %s177, %s179
    %p183 = scmp.eq.s32.totalorder %s17, 0
    %p184 = por %p182, %p183
    %p185 = scmp.ne.s32.totalorder %s177, %s179
    %p186 = scmp.eq.s32.totalorder %s22, 1
    %p187 = por %p185, %p186
    %p188 = scmp.ne.s32.totalorder %s179, %s180
    %p189 = scmp.eq.s32.totalorder %s22, 0
    %p190 = por %p188, %p189
    %p191 = scmp.ne.s32.totalorder %s179, %s180
    %p192 = scmp.eq.s32.totalorder %s23, 1
    %p193 = por %p191, %p192
    %p195 = scmp.ne.s32.totalorder %s180, %s194
    %p196 = scmp.eq.s32.totalorder %s23, 0
    %p197 = por %p195, %p196
    %s199 = sadd.s32 %s198, 1
    %p202 = scmp.eq.s32.totalorder %s17, 1
    %p203 = scmp.ne.s32.totalorder %s198, %s200
    %p204 = scmp.eq.s32.totalorder %s17, 0
    %p205 = por %p203, %p204
    %p206 = scmp.ne.s32.totalorder %s198, %s200
    %p207 = scmp.eq.s32.totalorder %s22, 1
    %p208 = por %p206, %p207
    %p209 = scmp.ne.s32.totalorder %s200, %s201
    %p210 = scmp.eq.s32.totalorder %s22, 0
    %p211 = por %p209, %p210
    %p212 = scmp.ne.s32.totalorder %s200, %s201
    %p213 = scmp.eq.s32.totalorder %s23, 1
    %p214 = por %p212, %p213
    %p216 = scmp.ne.s32.totalorder %s201, %s215
    %p217 = scmp.eq.s32.totalorder %s23, 0
    %p218 = por %p216, %p217
    %s219 = ssub.s32 %s17, %s24
    %p220 = scmp.eq.s32.totalorder %s219, 0
    %s222 = sadd.s32 %s221, 1
    %s223 = scalar_select %p220, %s221, %s222
    %p226 = pneg %p220
    %p227 = scmp.eq.s32.totalorder %s17, 1
    %p228 = por %p226, %p227
    %p229 = scmp.ne.s32.totalorder %s221, %s224
    %p230 = scmp.eq.s32.totalorder %s17, 0
    %p231 = por %p229, %p230
    %p232 = scmp.ne.s32.totalorder %s221, %s224
    %p233 = scmp.eq.s32.totalorder %s22, 1
    %p234 = por %p232, %p233
    %p235 = scmp.ne.s32.totalorder %s224, %s225
    %p236 = scmp.eq.s32.totalorder %s22, 0
    %p237 = por %p235, %p236
    %p238 = scmp.ne.s32.totalorder %s224, %s225
    %p239 = scmp.eq.s32.totalorder %s23, 1
    %p240 = por %p238, %p239
    %p242 = scmp.ne.s32.totalorder %s225, %s241
    %p243 = scmp.eq.s32.totalorder %s23, 0
    %p244 = por %p242, %p243
    %p245 = scmp.le.s32.totalorder 1, %s17
    %p246 = scmp.lt.s32.totalorder %s17, 3
    %p247 = pnand %p245, %p246
    %p248 = pneg %p247
    // Predicated region
    $region9: #{neural_network_forward.1} parent=5 // pred_check
      _
    $region10: #{neural_network_forward.1} parent=5 // pred_check_branch
      %250 = sbr.rel (%p247) target = $region12
    $region11: #{neural_network_forward.1} parent=5 // pred_region
      %s251 = ssub.s32 %s17, 1
      // Predicated region
      $region13: #{neural_network_forward.1} parent=11 // pred_check
        %p252 = pneg %p64
      $region14: #{neural_network_forward.1} parent=11 // pred_check_branch
        %254 = sbr.rel (%p252) target = $region16
      $region15: #{neural_network_forward.1} parent=11 // pred_region
        _
      $region16: #{neural_network_forward.1} parent=11 // pred_fallthru
        _
      // Predicated region
      $region17: #{neural_network_forward.1} parent=11 // pred_check
        %p255 = pneg %p85
      $region18: #{neural_network_forward.1} parent=11 // pred_check_branch
        %257 = sbr.rel (%p255) target = $region20
      $region19: #{neural_network_forward.1} parent=11 // pred_region
        _
      $region20: #{neural_network_forward.1} parent=11 // pred_fallthru
        _
      // Predicated region
      $region21: #{neural_network_forward.1} parent=11 // pred_check
        %p258 = pneg %p106
      $region22: #{neural_network_forward.1} parent=11 // pred_check_branch
        %260 = sbr.rel (%p258) target = $region24
      $region23: #{neural_network_forward.1} parent=11 // pred_region
        _
      $region24: #{neural_network_forward.1} parent=11 // pred_fallthru
        _
      // Predicated region
      $region25: #{neural_network_forward.1} parent=11 // pred_check
        %p261 = pneg %p127
      $region26: #{neural_network_forward.1} parent=11 // pred_check_branch
        %263 = sbr.rel (%p261) target = $region28
      $region27: #{neural_network_forward.1} parent=11 // pred_region
        _
      $region28: #{neural_network_forward.1} parent=11 // pred_fallthru
        _
      // Predicated region
      $region29: #{neural_network_forward.1} parent=11 // pred_check
        %p264 = pneg %p148
      $region30: #{neural_network_forward.1} parent=11 // pred_check_branch
        %266 = sbr.rel (%p264) target = $region32
      $region31: #{neural_network_forward.1} parent=11 // pred_region
        _
      $region32: #{neural_network_forward.1} parent=11 // pred_fallthru
        _
      // Predicated region
      $region33: #{neural_network_forward.1} parent=11 // pred_check
        %p267 = pneg %p169
      $region34: #{neural_network_forward.1} parent=11 // pred_check_branch
        %269 = sbr.rel (%p267) target = $region36
      $region35: #{neural_network_forward.1} parent=11 // pred_region
        _
      $region36: #{neural_network_forward.1} parent=11 // pred_fallthru
        _
      // Predicated region
      $region37: #{neural_network_forward.1} parent=11 // pred_check
        %p270 = pneg %p190
      $region38: #{neural_network_forward.1} parent=11 // pred_check_branch
        %272 = sbr.rel (%p270) target = $region40
      $region39: #{neural_network_forward.1} parent=11 // pred_region
        _
      $region40: #{neural_network_forward.1} parent=11 // pred_fallthru
        _
      // Predicated region
      $region41: #{neural_network_forward.1} parent=11 // pred_check
        %p273 = pneg %p211
      $region42: #{neural_network_forward.1} parent=11 // pred_check_branch
        %275 = sbr.rel (%p273) target = $region44
      $region43: #{neural_network_forward.1} parent=11 // pred_region
        _
      $region44: #{neural_network_forward.1} parent=11 // pred_fallthru
        _
    $region12: #{neural_network_forward.1} parent=5 // pred_fallthru
      _
    %p276 = scmp.lt.s32.totalorder %s17, 2
    // Predicated region
    $region45: #{neural_network_forward.1} parent=5 // pred_check
      %p277 = pneg %p276
    $region46: #{neural_network_forward.1} parent=5 // pred_check_branch
      %279 = sbr.rel (%p277) target = $region48
    $region47: #{neural_network_forward.1} parent=5 // pred_region
      // Predicated region
      $region49: #{neural_network_forward.1} parent=47 // pred_check
        %p280 = pneg %p37
      $region50: #{neural_network_forward.1} parent=47 // pred_check_branch
        %282 = sbr.rel (%p280) target = $region52
      $region51: #{neural_network_forward.1} parent=47 // pred_region
        %p283 = scmp.lt.s32.totalorder %s17, 1
        %s284 = scalar_select %p283, %s17, 1
        %s285 = smul.addr %s284, 8
        %s286 = scalar_lea.vmem %s0, %s285
      $region52: #{neural_network_forward.1} parent=47 // pred_fallthru
        _
    $region48: #{neural_network_forward.1} parent=5 // pred_fallthru
      _
    %p287 = scmp.le.s32.totalorder 1, %s17
    %p288 = scmp.lt.s32.totalorder %s17, 3
    %p289 = pnand %p287, %p288
    %p290 = pneg %p289
    // Predicated region
    $region53: #{neural_network_forward.1} parent=5 // pred_check
      _
    $region54: #{neural_network_forward.1} parent=5 // pred_check_branch
      %292 = sbr.rel (%p289) target = $region56
    $region55: #{neural_network_forward.1} parent=5 // pred_region
      %s293 = ssub.s32 %s17, 1
      %p294 = scmp.lt.s32.totalorder %s22, 1
      %s295 = scalar_select %p294, %s22, 1
      %s296 = smul.addr %s295, 8
      %s297 = scalar_lea.vmem %s0, %s296
      %p298 = pneg %p43
      %p299 = pneg %p40
      %p300 = pneg %p64
      %p301 = pneg %p61
      %p302 = pneg %p85
      %p303 = pneg %p82
      %p304 = pneg %p106
      %p305 = pneg %p103
      %p306 = pneg %p127
      %p307 = pneg %p124
      %p308 = pneg %p148
      %p309 = pneg %p145
      %p310 = pneg %p169
      %p311 = pneg %p166
      %p312 = pneg %p190
      %p313 = pneg %p187
      %p314 = pneg %p211
      %p315 = pneg %p208
      %p316 = pneg %p237
      %p317 = pneg %p234
      %p318 = scmp.lt.s32.totalorder %s22, 1
      %s319 = scalar_select %p318, %s22, 1
      %s320 = scalar_lea.vmem %s9, %s319
      %p321 = scmp.lt.s32.totalorder %s22, 1
      %s322 = scalar_select %p321, %s22, 1
      %s323 = smul.addr %s322, 8
      %s324 = scalar_lea.vmem %s0, %s323
      %p325 = scmp.lt.s32.totalorder %s22, 1
      %s326 = scalar_select %p325, %s22, 1
      %s327 = scalar_lea.vmem %s9, %s326
      %v328 = vld [vmem:[%s1] sm:$0xff]
      %v329 = vld [vmem:[%s324] sm:$0x3f]
      %v330 = vld [vmem:[%s2] sm:$0xff]
      %332 = vset.pattern.permute.xlu0 0
      %333 = vperm.xlu0 %332, %v330
      %v334 = vpop.permute.xlu0 %333
      %vm336 = vcmask 48128
      %v338 = vsel %vm336, %v328, 0
      %vm340 = vcmask 1045504
      %v342 = vsel %vm340, %v329, 0
      %344 = vmatprep.subr.mxu0 0.0
      %v345 = vand.u32 %v342, 4294901760
      %346 = vmatpush1.msra.mxu0 %v345
      %347 = vmatprep.subr.mxu0 0.0
      %348 = vmatpush1.msra.mxu0 0.0
      %349 = vmatprep.subr.mxu0 0.0
      %350 = vmatpush1.msra.mxu0 0.0
      %351 = vmatprep.subr.mxu0 0.0
      %352 = vmatpush1.msra.mxu0 0.0
      %353 = vmatprep.subr.mxu0 0.0
      %354 = vmatpush1.msra.mxu0 0.0
      %355 = vmatprep.subr.mxu0 0.0
      %356 = vmatpush1.msra.mxu0 0.0
      %357 = vmatprep.subr.mxu0 0.0
      %358 = vmatpush1.msra.mxu0 0.0
      %359 = vmatprep.subr.mxu0 0.0
      %360 = vmatpush1.msra.mxu0 0.0
      %361 = vmatprep.subr.mxu0 0.0
      %362 = vmatpush1.msra.mxu0 0.0
      %363 = vmatprep.subr.mxu0 0.0
      %364 = vmatpush1.msra.mxu0 0.0
      %365 = vmatprep.subr.mxu0 0.0
      %366 = vmatpush1.msra.mxu0 0.0
      %367 = vmatprep.subr.mxu0 0.0
      %368 = vmatpush1.msra.mxu0 0.0
      %369 = vmatprep.subr.mxu0 0.0
      %370 = vmatpush1.msra.mxu0 0.0
      %371 = vmatprep.subr.mxu0 0.0
      %372 = vmatpush1.msra.mxu0 0.0
      %373 = vmatprep.subr.mxu0 0.0
      %374 = vmatpush1.msra.mxu0 0.0
      %375 = vmatprep.subr.mxu0 0.0
      %376 = vmatpush1.msra.mxu0 0.0
      %377 = vmatprep.subr.mxu0 0.0
      %378 = vmatpush1.msra.mxu0 0.0
      %379 = vmatprep.subr.mxu0 0.0
      %380 = vmatpush1.msra.mxu0 0.0
      %381 = vmatprep.subr.mxu0 0.0
      %382 = vmatpush1.msra.mxu0 0.0
      %383 = vmatprep.subr.mxu0 0.0
      %384 = vmatpush1.msra.mxu0 0.0
      %385 = vmatprep.subr.mxu0 0.0
      %386 = vmatpush1.msra.mxu0 0.0
      %387 = vmatprep.subr.mxu0 0.0
      %388 = vmatpush1.msra.mxu0 0.0
      %389 = vmatprep.subr.mxu0 0.0
      %390 = vmatpush1.msra.mxu0 0.0
      %391 = vmatprep.subr.mxu0 0.0
      %392 = vmatpush1.msra.mxu0 0.0
      %393 = vmatprep.subr.mxu0 0.0
      %394 = vmatpush1.msra.mxu0 0.0
      %395 = vmatprep.subr.mxu0 0.0
      %396 = vmatpush1.msra.mxu0 0.0
      %397 = vmatprep.subr.mxu0 0.0
      %398 = vmatpush1.msra.mxu0 0.0
      %399 = vmatprep.subr.mxu0 0.0
      %400 = vmatpush1.msra.mxu0 0.0
      %401 = vmatprep.subr.mxu0 0.0
      %402 = vmatpush1.msra.mxu0 0.0
      %403 = vmatprep.subr.mxu0 0.0
      %404 = vmatpush1.msra.mxu0 0.0
      %405 = vmatprep.subr.mxu0 0.0
      %406 = vmatpush1.msra.mxu0 0.0
      %407 = vmatprep.subr.mxu0 0.0
      %408 = vmatpush1.msra.mxu0 0.0
      %409 = vmatprep.mubr.f32.mxu0 0.0
      %v410 = vand.u32 %v338, 4294901760
      %v411 = vsub.f32 %v338, %v410
      %v412 = vand.u32 %v411, 4294901760
      %v413 = vsub.f32 %v411, %v412
      %v414 = vand.u32 %v413, 4294901760
      %415 = vmatmul.mubr.f32.gmra.mrb[0].mxu0 %v414
      %v416 = vpop.f32.mrb[0].mxu0
      %v417 = vadd.f32 %v334, %v416
      %v418 = vpop.f32.mrb[0].mxu0
      %419 = vdwg.mxu0
      %420 = vmatprep.subr.mxu0 0.0
      %v421 = vand.u32 %v342, 4294901760
      %v422 = vsub.f32 %v342, %v421
      %v423 = vand.u32 %v422, 4294901760
      %v424 = vsub.f32 %v422, %v423
      %v425 = vand.u32 %v424, 4294901760
      %426 = vmatpush1.msra.mxu0 %v425
      %427 = vmatprep.subr.mxu0 0.0
      %428 = vmatpush1.msra.mxu0 0.0
      %429 = vmatprep.subr.mxu0 0.0
      %430 = vmatpush1.msra.mxu0 0.0
      %431 = vmatprep.subr.mxu0 0.0
      %432 = vmatpush1.msra.mxu0 0.0
      %433 = vmatprep.subr.mxu0 0.0
      %434 = vmatpush1.msra.mxu0 0.0
      %435 = vmatprep.subr.mxu0 0.0
      %436 = vmatpush1.msra.mxu0 0.0
      %437 = vmatprep.subr.mxu0 0.0
      %438 = vmatpush1.msra.mxu0 0.0
      %439 = vmatprep.subr.mxu0 0.0
      %440 = vmatpush1.msra.mxu0 0.0
      %441 = vmatprep.subr.mxu0 0.0
      %442 = vmatpush1.msra.mxu0 0.0
      %443 = vmatprep.subr.mxu0 0.0
      %444 = vmatpush1.msra.mxu0 0.0
      %445 = vmatprep.subr.mxu0 0.0
      %446 = vmatpush1.msra.mxu0 0.0
      %447 = vmatprep.subr.mxu0 0.0
      %448 = vmatpush1.msra.mxu0 0.0
      %449 = vmatprep.subr.mxu0 0.0
      %450 = vmatpush1.msra.mxu0 0.0
      %451 = vmatprep.subr.mxu0 0.0
      %452 = vmatpush1.msra.mxu0 0.0
      %453 = vmatprep.subr.mxu0 0.0
      %454 = vmatpush1.msra.mxu0 0.0
      %455 = vmatprep.subr.mxu0 0.0
      %456 = vmatpush1.msra.mxu0 0.0
      %457 = vmatprep.subr.mxu0 0.0
      %458 = vmatpush1.msra.mxu0 0.0
      %459 = vmatprep.subr.mxu0 0.0
      %460 = vmatpush1.msra.mxu0 0.0
      %461 = vmatprep.subr.mxu0 0.0
      %462 = vmatpush1.msra.mxu0 0.0
      %463 = vmatprep.subr.mxu0 0.0
      %464 = vmatpush1.msra.mxu0 0.0
      %465 = vmatprep.subr.mxu0 0.0
      %466 = vmatpush1.msra.mxu0 0.0
      %467 = vmatprep.subr.mxu0 0.0
      %468 = vmatpush1.msra.mxu0 0.0
      %469 = vmatprep.subr.mxu0 0.0
      %470 = vmatpush1.msra.mxu0 0.0
      %471 = vmatprep.subr.mxu0 0.0
      %472 = vmatpush1.msra.mxu0 0.0
      %473 = vmatprep.subr.mxu0 0.0
      %474 = vmatpush1.msra.mxu0 0.0
      %475 = vmatprep.subr.mxu0 0.0
      %476 = vmatpush1.msra.mxu0 0.0
      %477 = vmatprep.subr.mxu0 0.0
      %478 = vmatpush1.msra.mxu0 0.0
      %479 = vmatprep.subr.mxu0 0.0
      %480 = vmatpush1.msra.mxu0 0.0
      %481 = vmatprep.subr.mxu0 0.0
      %482 = vmatpush1.msra.mxu0 0.0
      %483 = vmatprep.subr.mxu0 0.0
      %484 = vmatpush1.msra.mxu0 0.0
      %485 = vmatprep.subr.mxu0 0.0
      %486 = vmatpush1.msra.mxu0 0.0
      %487 = vmatprep.subr.mxu0 0.0
      %488 = vmatpush1.msra.mxu0 0.0
      %489 = vmatprep.mubr.f32.mxu0 0.0
      %v490 = vand.u32 %v338, 4294901760
      %491 = vmatmul.mubr.f32.gmra.mrb[0].mxu0 %v490
      %v492 = vpop.f32.mrb[0].mxu0
      %v493 = vadd.f32 %v417, %v492
      %v494 = vpop.f32.mrb[0].mxu0
      %495 = vdwg.mxu0
      %496 = vmatprep.subr.mxu0 0.0
      %v497 = vand.u32 %v342, 4294901760
      %v498 = vsub.f32 %v342, %v497
      %499 = vmatpush1.msra.mxu0 %v498
      %500 = vmatprep.subr.mxu0 0.0
      %501 = vmatpush1.msra.mxu0 0.0
      %502 = vmatprep.subr.mxu0 0.0
      %503 = vmatpush1.msra.mxu0 0.0
      %504 = vmatprep.subr.mxu0 0.0
      %505 = vmatpush1.msra.mxu0 0.0
      %506 = vmatprep.subr.mxu0 0.0
      %507 = vmatpush1.msra.mxu0 0.0
      %508 = vmatprep.subr.mxu0 0.0
      %509 = vmatpush1.msra.mxu0 0.0
      %510 = vmatprep.subr.mxu0 0.0
      %511 = vmatpush1.msra.mxu0 0.0
      %512 = vmatprep.subr.mxu0 0.0
      %513 = vmatpush1.msra.mxu0 0.0
      %514 = vmatprep.subr.mxu0 0.0
      %515 = vmatpush1.msra.mxu0 0.0
      %516 = vmatprep.subr.mxu0 0.0
      %517 = vmatpush1.msra.mxu0 0.0
      %518 = vmatprep.subr.mxu0 0.0
      %519 = vmatpush1.msra.mxu0 0.0
      %520 = vmatprep.subr.mxu0 0.0
      %521 = vmatpush1.msra.mxu0 0.0
      %522 = vmatprep.subr.mxu0 0.0
      %523 = vmatpush1.msra.mxu0 0.0
      %524 = vmatprep.subr.mxu0 0.0
      %525 = vmatpush1.msra.mxu0 0.0
      %526 = vmatprep.subr.mxu0 0.0
      %527 = vmatpush1.msra.mxu0 0.0
      %528 = vmatprep.subr.mxu0 0.0
      %529 = vmatpush1.msra.mxu0 0.0
      %530 = vmatprep.subr.mxu0 0.0
      %531 = vmatpush1.msra.mxu0 0.0
      %532 = vmatprep.subr.mxu0 0.0
      %533 = vmatpush1.msra.mxu0 0.0
      %534 = vmatprep.subr.mxu0 0.0
      %535 = vmatpush1.msra.mxu0 0.0
      %536 = vmatprep.subr.mxu0 0.0
      %537 = vmatpush1.msra.mxu0 0.0
      %538 = vmatprep.subr.mxu0 0.0
      %539 = vmatpush1.msra.mxu0 0.0
      %540 = vmatprep.subr.mxu0 0.0
      %541 = vmatpush1.msra.mxu0 0.0
      %542 = vmatprep.subr.mxu0 0.0
      %543 = vmatpush1.msra.mxu0 0.0
      %544 = vmatprep.subr.mxu0 0.0
      %545 = vmatpush1.msra.mxu0 0.0
      %546 = vmatprep.subr.mxu0 0.0
      %547 = vmatpush1.msra.mxu0 0.0
      %548 = vmatprep.subr.mxu0 0.0
      %549 = vmatpush1.msra.mxu0 0.0
      %550 = vmatprep.subr.mxu0 0.0
      %551 = vmatpush1.msra.mxu0 0.0
      %552 = vmatprep.subr.mxu0 0.0
      %553 = vmatpush1.msra.mxu0 0.0
      %554 = vmatprep.subr.mxu0 0.0
      %555 = vmatpush1.msra.mxu0 0.0
      %556 = vmatprep.subr.mxu0 0.0
      %557 = vmatpush1.msra.mxu0 0.0
      %558 = vmatprep.subr.mxu0 0.0
      %559 = vmatpush1.msra.mxu0 0.0
      %560 = vmatprep.subr.mxu0 0.0
      %561 = vmatpush1.msra.mxu0 0.0
      %562 = vmatprep.mubr.f32.mxu0 0.0
      %v563 = vand.u32 %v338, 4294901760
      %v564 = vsub.f32 %v338, %v563
      %565 = vmatmul.mubr.f32.gmra.mrb[0].mxu0 %v564
      %v566 = vpop.f32.mrb[0].mxu0
      %v567 = vadd.f32 %v493, %v566
      %v568 = vpop.f32.mrb[0].mxu0
      %569 = vdwg.mxu0
      %570 = vmatprep.subr.mxu0 0.0
      %v571 = vand.u32 %v342, 4294901760
      %572 = vmatpush1.msra.mxu0 %v571
      %573 = vmatprep.subr.mxu0 0.0
      %574 = vmatpush1.msra.mxu0 0.0
      %575 = vmatprep.subr.mxu0 0.0
      %576 = vmatpush1.msra.mxu0 0.0
      %577 = vmatprep.subr.mxu0 0.0
      %578 = vmatpush1.msra.mxu0 0.0
      %579 = vmatprep.subr.mxu0 0.0
      %580 = vmatpush1.msra.mxu0 0.0
      %581 = vmatprep.subr.mxu0 0.0
      %582 = vmatpush1.msra.mxu0 0.0
      %583 = vmatprep.subr.mxu0 0.0
      %584 = vmatpush1.msra.mxu0 0.0
      %585 = vmatprep.subr.mxu0 0.0
      %586 = vmatpush1.msra.mxu0 0.0
      %587 = vmatprep.subr.mxu0 0.0
      %588 = vmatpush1.msra.mxu0 0.0
      %589 = vmatprep.subr.mxu0 0.0
      %590 = vmatpush1.msra.mxu0 0.0
      %591 = vmatprep.subr.mxu0 0.0
      %592 = vmatpush1.msra.mxu0 0.0
      %593 = vmatprep.subr.mxu0 0.0
      %594 = vmatpush1.msra.mxu0 0.0
      %595 = vmatprep.subr.mxu0 0.0
      %596 = vmatpush1.msra.mxu0 0.0
      %597 = vmatprep.subr.mxu0 0.0
      %598 = vmatpush1.msra.mxu0 0.0
      %599 = vmatprep.subr.mxu0 0.0
      %600 = vmatpush1.msra.mxu0 0.0
      %601 = vmatprep.subr.mxu0 0.0
      %602 = vmatpush1.msra.mxu0 0.0
      %603 = vmatprep.subr.mxu0 0.0
      %604 = vmatpush1.msra.mxu0 0.0
      %605 = vmatprep.subr.mxu0 0.0
      %606 = vmatpush1.msra.mxu0 0.0
      %607 = vmatprep.subr.mxu0 0.0
      %608 = vmatpush1.msra.mxu0 0.0
      %609 = vmatprep.subr.mxu0 0.0
      %610 = vmatpush1.msra.mxu0 0.0
      %611 = vmatprep.subr.mxu0 0.0
      %612 = vmatpush1.msra.mxu0 0.0
      %613 = vmatprep.subr.mxu0 0.0
      %614 = vmatpush1.msra.mxu0 0.0
      %615 = vmatprep.subr.mxu0 0.0
      %616 = vmatpush1.msra.mxu0 0.0
      %617 = vmatprep.subr.mxu0 0.0
      %618 = vmatpush1.msra.mxu0 0.0
      %619 = vmatprep.subr.mxu0 0.0
      %620 = vmatpush1.msra.mxu0 0.0
      %621 = vmatprep.subr.mxu0 0.0
      %622 = vmatpush1.msra.mxu0 0.0
      %623 = vmatprep.subr.mxu0 0.0
      %624 = vmatpush1.msra.mxu0 0.0
      %625 = vmatprep.subr.mxu0 0.0
      %626 = vmatpush1.msra.mxu0 0.0
      %627 = vmatprep.subr.mxu0 0.0
      %628 = vmatpush1.msra.mxu0 0.0
      %629 = vmatprep.subr.mxu0 0.0
      %630 = vmatpush1.msra.mxu0 0.0
      %631 = vmatprep.subr.mxu0 0.0
      %632 = vmatpush1.msra.mxu0 0.0
      %633 = vmatprep.subr.mxu0 0.0
      %634 = vmatpush1.msra.mxu0 0.0
      %635 = vmatprep.mubr.f32.mxu0 0.0
      %v636 = vand.u32 %v338, 4294901760
      %v637 = vsub.f32 %v338, %v636
      %v638 = vand.u32 %v637, 4294901760
      %639 = vmatmul.mubr.f32.gmra.mrb[0].mxu0 %v638
      %v640 = vpop.f32.mrb[0].mxu0
      %v641 = vadd.f32 %v567, %v640
      %v642 = vpop.f32.mrb[0].mxu0
      %643 = vdwg.mxu0
      %644 = vmatprep.subr.mxu0 0.0
      %v645 = vand.u32 %v342, 4294901760
      %v646 = vsub.f32 %v342, %v645
      %v647 = vand.u32 %v646, 4294901760
      %648 = vmatpush1.msra.mxu0 %v647
      %649 = vmatprep.subr.mxu0 0.0
      %650 = vmatpush1.msra.mxu0 0.0
      %651 = vmatprep.subr.mxu0 0.0
      %652 = vmatpush1.msra.mxu0 0.0
      %653 = vmatprep.subr.mxu0 0.0
      %654 = vmatpush1.msra.mxu0 0.0
      %655 = vmatprep.subr.mxu0 0.0
      %656 = vmatpush1.msra.mxu0 0.0
      %657 = vmatprep.subr.mxu0 0.0
      %658 = vmatpush1.msra.mxu0 0.0
      %659 = vmatprep.subr.mxu0 0.0
      %660 = vmatpush1.msra.mxu0 0.0
      %661 = vmatprep.subr.mxu0 0.0
      %662 = vmatpush1.msra.mxu0 0.0
      %663 = vmatprep.subr.mxu0 0.0
      %664 = vmatpush1.msra.mxu0 0.0
      %665 = vmatprep.subr.mxu0 0.0
      %666 = vmatpush1.msra.mxu0 0.0
      %667 = vmatprep.subr.mxu0 0.0
      %668 = vmatpush1.msra.mxu0 0.0
      %669 = vmatprep.subr.mxu0 0.0
      %670 = vmatpush1.msra.mxu0 0.0
      %671 = vmatprep.subr.mxu0 0.0
      %672 = vmatpush1.msra.mxu0 0.0
      %673 = vmatprep.subr.mxu0 0.0
      %674 = vmatpush1.msra.mxu0 0.0
      %675 = vmatprep.subr.mxu0 0.0
      %676 = vmatpush1.msra.mxu0 0.0
      %677 = vmatprep.subr.mxu0 0.0
      %678 = vmatpush1.msra.mxu0 0.0
      %679 = vmatprep.subr.mxu0 0.0
      %680 = vmatpush1.msra.mxu0 0.0
      %681 = vmatprep.subr.mxu0 0.0
      %682 = vmatpush1.msra.mxu0 0.0
      %683 = vmatprep.subr.mxu0 0.0
      %684 = vmatpush1.msra.mxu0 0.0
      %685 = vmatprep.subr.mxu0 0.0
      %686 = vmatpush1.msra.mxu0 0.0
      %687 = vmatprep.subr.mxu0 0.0
      %688 = vmatpush1.msra.mxu0 0.0
      %689 = vmatprep.subr.mxu0 0.0
      %690 = vmatpush1.msra.mxu0 0.0
      %691 = vmatprep.subr.mxu0 0.0
      %692 = vmatpush1.msra.mxu0 0.0
      %693 = vmatprep.subr.mxu0 0.0
      %694 = vmatpush1.msra.mxu0 0.0
      %695 = vmatprep.subr.mxu0 0.0
      %696 = vmatpush1.msra.mxu0 0.0
      %697 = vmatprep.subr.mxu0 0.0
      %698 = vmatpush1.msra.mxu0 0.0
      %699 = vmatprep.subr.mxu0 0.0
      %700 = vmatpush1.msra.mxu0 0.0
      %701 = vmatprep.subr.mxu0 0.0
      %702 = vmatpush1.msra.mxu0 0.0
      %703 = vmatprep.subr.mxu0 0.0
      %704 = vmatpush1.msra.mxu0 0.0
      %705 = vmatprep.subr.mxu0 0.0
      %706 = vmatpush1.msra.mxu0 0.0
      %707 = vmatprep.subr.mxu0 0.0
      %708 = vmatpush1.msra.mxu0 0.0
      %709 = vmatprep.subr.mxu0 0.0
      %710 = vmatpush1.msra.mxu0 0.0
      %711 = vmatprep.mubr.f32.mxu0 0.0
      %v712 = vand.u32 %v338, 4294901760
      %713 = vmatmul.mubr.f32.gmra.mrb[0].mxu0 %v712
      %v714 = vpop.f32.mrb[0].mxu0
      %v715 = vadd.f32 %v641, %v714
      %v716 = vpop.f32.mrb[0].mxu0
      %717 = vdwg.mxu0
      %718 = vmatprep.subr.mxu0 0.0
      %v719 = vand.u32 %v342, 4294901760
      %720 = vmatpush1.msra.mxu0 %v719
      %721 = vmatprep.subr.mxu0 0.0
      %722 = vmatpush1.msra.mxu0 0.0
      %723 = vmatprep.subr.mxu0 0.0
      %724 = vmatpush1.msra.mxu0 0.0
      %725 = vmatprep.subr.mxu0 0.0
      %726 = vmatpush1.msra.mxu0 0.0
      %727 = vmatprep.subr.mxu0 0.0
      %728 = vmatpush1.msra.mxu0 0.0
      %729 = vmatprep.subr.mxu0 0.0
      %730 = vmatpush1.msra.mxu0 0.0
      %731 = vmatprep.subr.mxu0 0.0
      %732 = vmatpush1.msra.mxu0 0.0
      %733 = vmatprep.subr.mxu0 0.0
      %734 = vmatpush1.msra.mxu0 0.0
      %735 = vmatprep.subr.mxu0 0.0
      %736 = vmatpush1.msra.mxu0 0.0
      %737 = vmatprep.subr.mxu0 0.0
      %738 = vmatpush1.msra.mxu0 0.0
      %739 = vmatprep.subr.mxu0 0.0
      %740 = vmatpush1.msra.mxu0 0.0
      %741 = vmatprep.subr.mxu0 0.0
      %742 = vmatpush1.msra.mxu0 0.0
      %743 = vmatprep.subr.mxu0 0.0
      %744 = vmatpush1.msra.mxu0 0.0
      %745 = vmatprep.subr.mxu0 0.0
      %746 = vmatpush1.msra.mxu0 0.0
      %747 = vmatprep.subr.mxu0 0.0
      %748 = vmatpush1.msra.mxu0 0.0
      %749 = vmatprep.subr.mxu0 0.0
      %750 = vmatpush1.msra.mxu0 0.0
      %751 = vmatprep.subr.mxu0 0.0
      %752 = vmatpush1.msra.mxu0 0.0
      %753 = vmatprep.subr.mxu0 0.0
      %754 = vmatpush1.msra.mxu0 0.0
      %755 = vmatprep.subr.mxu0 0.0
      %756 = vmatpush1.msra.mxu0 0.0
      %757 = vmatprep.subr.mxu0 0.0
      %758 = vmatpush1.msra.mxu0 0.0
      %759 = vmatprep.subr.mxu0 0.0
      %760 = vmatpush1.msra.mxu0 0.0
      %761 = vmatprep.subr.mxu0 0.0
      %762 = vmatpush1.msra.mxu0 0.0
      %763 = vmatprep.subr.mxu0 0.0
      %764 = vmatpush1.msra.mxu0 0.0
      %765 = vmatprep.subr.mxu0 0.0
      %766 = vmatpush1.msra.mxu0 0.0
      %767 = vmatprep.subr.mxu0 0.0
      %768 = vmatpush1.msra.mxu0 0.0
      %769 = vmatprep.subr.mxu0 0.0
      %770 = vmatpush1.msra.mxu0 0.0
      %771 = vmatprep.subr.mxu0 0.0
      %772 = vmatpush1.msra.mxu0 0.0
      %773 = vmatprep.subr.mxu0 0.0
      %774 = vmatpush1.msra.mxu0 0.0
      %775 = vmatprep.subr.mxu0 0.0
      %776 = vmatpush1.msra.mxu0 0.0
      %777 = vmatprep.subr.mxu0 0.0
      %778 = vmatpush1.msra.mxu0 0.0
      %779 = vmatprep.subr.mxu0 0.0
      %780 = vmatpush1.msra.mxu0 0.0
      %781 = vmatprep.subr.mxu0 0.0
      %782 = vmatpush1.msra.mxu0 0.0
      %783 = vmatprep.mubr.f32.mxu0 0.0
      %v784 = vand.u32 %v338, 4294901760
      %785 = vmatmul.mubr.f32.gmra.mrb[0].mxu0 %v784
      %v786 = vpop.f32.mrb[0].mxu0
      %v787 = vadd.f32 %v715, %v786
      %v788 = vpop.f32.mrb[0].mxu0
      %789 = vdwg.mxu0
      %v790 = vtanh.pop %v787
      %v791 = vld [vmem:[%s3] sm:$0xff]
      %v792 = vld [vmem:[%s4] sm:$0xff]
      %794 = vset.pattern.permute.xlu0 0
      %795 = vperm.xlu0 %794, %v792
      %v796 = vpop.permute.xlu0 %795
      %vm798 = vcmask 64512
      %v800 = vsel %vm798, %v791, 0
      %802 = vmatprep.subr.mxu0 0.0
      %v803 = vand.u32 %v790, 4294901760
      %804 = vmatpush1.msra.mxu0 %v803
      %805 = vmatprep.subr.mxu0 0.0
      %806 = vmatpush1.msra.mxu0 0.0
      %807 = vmatprep.subr.mxu0 0.0
      %808 = vmatpush1.msra.mxu0 0.0
      %809 = vmatprep.subr.mxu0 0.0
      %810 = vmatpush1.msra.mxu0 0.0
      %811 = vmatprep.subr.mxu0 0.0
      %812 = vmatpush1.msra.mxu0 0.0
      %813 = vmatprep.subr.mxu0 0.0
      %814 = vmatpush1.msra.mxu0 0.0
      %815 = vmatprep.subr.mxu0 0.0
      %816 = vmatpush1.msra.mxu0 0.0
      %817 = vmatprep.subr.mxu0 0.0
      %818 = vmatpush1.msra.mxu0 0.0
      %819 = vmatprep.subr.mxu0 0.0
      %820 = vmatpush1.msra.mxu0 0.0
      %821 = vmatprep.subr.mxu0 0.0
      %822 = vmatpush1.msra.mxu0 0.0
      %823 = vmatprep.subr.mxu0 0.0
      %824 = vmatpush1.msra.mxu0 0.0
      %825 = vmatprep.subr.mxu0 0.0
      %826 = vmatpush1.msra.mxu0 0.0
      %827 = vmatprep.subr.mxu0 0.0
      %828 = vmatpush1.msra.mxu0 0.0
      %829 = vmatprep.subr.mxu0 0.0
      %830 = vmatpush1.msra.mxu0 0.0
      %831 = vmatprep.subr.mxu0 0.0
      %832 = vmatpush1.msra.mxu0 0.0
      %833 = vmatprep.subr.mxu0 0.0
      %834 = vmatpush1.msra.mxu0 0.0
      %835 = vmatprep.subr.mxu0 0.0
      %836 = vmatpush1.msra.mxu0 0.0
      %837 = vmatprep.subr.mxu0 0.0
      %838 = vmatpush1.msra.mxu0 0.0
      %839 = vmatprep.subr.mxu0 0.0
      %840 = vmatpush1.msra.mxu0 0.0
      %841 = vmatprep.subr.mxu0 0.0
      %842 = vmatpush1.msra.mxu0 0.0
      %843 = vmatprep.subr.mxu0 0.0
      %844 = vmatpush1.msra.mxu0 0.0
      %845 = vmatprep.subr.mxu0 0.0
      %846 = vmatpush1.msra.mxu0 0.0
      %847 = vmatprep.subr.mxu0 0.0
      %848 = vmatpush1.msra.mxu0 0.0
      %849 = vmatprep.subr.mxu0 0.0
      %850 = vmatpush1.msra.mxu0 0.0
      %851 = vmatprep.subr.mxu0 0.0
      %852 = vmatpush1.msra.mxu0 0.0
      %853 = vmatprep.subr.mxu0 0.0
      %854 = vmatpush1.msra.mxu0 0.0
      %855 = vmatprep.subr.mxu0 0.0
      %856 = vmatpush1.msra.mxu0 0.0
      %857 = vmatprep.subr.mxu0 0.0
      %858 = vmatpush1.msra.mxu0 0.0
      %859 = vmatprep.subr.mxu0 0.0
      %860 = vmatpush1.msra.mxu0 0.0
      %861 = vmatprep.subr.mxu0 0.0
      %862 = vmatpush1.msra.mxu0 0.0
      %863 = vmatprep.subr.mxu0 0.0
      %864 = vmatpush1.msra.mxu0 0.0
      %865 = vmatprep.subr.mxu0 0.0
      %866 = vmatpush1.msra.mxu0 0.0
      %867 = vmatprep.mubr.f32.mxu0 0.0
      %v868 = vand.u32 %v800, 4294901760
      %v869 = vsub.f32 %v800, %v868
      %v870 = vand.u32 %v869, 4294901760
      %v871 = vsub.f32 %v869, %v870
      %v872 = vand.u32 %v871, 4294901760
      %873 = vmatmul.mubr.f32.gmra.mrb[0].mxu0 %v872
      %v874 = vpop.f32.mrb[0].mxu0
      %v875 = vadd.f32 %v796, %v874
      %v876 = vpop.f32.mrb[0].mxu0
      %877 = vdwg.mxu0
      %878 = vmatprep.subr.mxu0 0.0
      %v879 = vand.u32 %v790, 4294901760
      %v880 = vsub.f32 %v790, %v879
      %v881 = vand.u32 %v880, 4294901760
      %v882 = vsub.f32 %v880, %v881
      %v883 = vand.u32 %v882, 4294901760
      %884 = vmatpush1.msra.mxu0 %v883
      %885 = vmatprep.subr.mxu0 0.0
      %886 = vmatpush1.msra.mxu0 0.0
      %887 = vmatprep.subr.mxu0 0.0
      %888 = vmatpush1.msra.mxu0 0.0
      %889 = vmatprep.subr.mxu0 0.0
      %890 = vmatpush1.msra.mxu0 0.0
      %891 = vmatprep.subr.mxu0 0.0
      %892 = vmatpush1.msra.mxu0 0.0
      %893 = vmatprep.subr.mxu0 0.0
      %894 = vmatpush1.msra.mxu0 0.0
      %895 = vmatprep.subr.mxu0 0.0
      %896 = vmatpush1.msra.mxu0 0.0
      %897 = vmatprep.subr.mxu0 0.0
      %898 = vmatpush1.msra.mxu0 0.0
      %899 = vmatprep.subr.mxu0 0.0
      %900 = vmatpush1.msra.mxu0 0.0
      %901 = vmatprep.subr.mxu0 0.0
      %902 = vmatpush1.msra.mxu0 0.0
      %903 = vmatprep.subr.mxu0 0.0
      %904 = vmatpush1.msra.mxu0 0.0
      %905 = vmatprep.subr.mxu0 0.0
      %906 = vmatpush1.msra.mxu0 0.0
      %907 = vmatprep.subr.mxu0 0.0
      %908 = vmatpush1.msra.mxu0 0.0
      %909 = vmatprep.subr.mxu0 0.0
      %910 = vmatpush1.msra.mxu0 0.0
      %911 = vmatprep.subr.mxu0 0.0
      %912 = vmatpush1.msra.mxu0 0.0
      %913 = vmatprep.subr.mxu0 0.0
      %914 = vmatpush1.msra.mxu0 0.0
      %915 = vmatprep.subr.mxu0 0.0
      %916 = vmatpush1.msra.mxu0 0.0
      %917 = vmatprep.subr.mxu0 0.0
      %918 = vmatpush1.msra.mxu0 0.0
      %919 = vmatprep.subr.mxu0 0.0
      %920 = vmatpush1.msra.mxu0 0.0
      %921 = vmatprep.subr.mxu0 0.0
      %922 = vmatpush1.msra.mxu0 0.0
      %923 = vmatprep.subr.mxu0 0.0
      %924 = vmatpush1.msra.mxu0 0.0
      %925 = vmatprep.subr.mxu0 0.0
      %926 = vmatpush1.msra.mxu0 0.0
      %927 = vmatprep.subr.mxu0 0.0
      %928 = vmatpush1.msra.mxu0 0.0
      %929 = vmatprep.subr.mxu0 0.0
      %930 = vmatpush1.msra.mxu0 0.0
      %931 = vmatprep.subr.mxu0 0.0
      %932 = vmatpush1.msra.mxu0 0.0
      %933 = vmatprep.subr.mxu0 0.0
      %934 = vmatpush1.msra.mxu0 0.0
      %935 = vmatprep.subr.mxu0 0.0
      %936 = vmatpush1.msra.mxu0 0.0
      %937 = vmatprep.subr.mxu0 0.0
      %938 = vmatpush1.msra.mxu0 0.0
      %939 = vmatprep.subr.mxu0 0.0
      %940 = vmatpush1.msra.mxu0 0.0
      %941 = vmatprep.subr.mxu0 0.0
      %942 = vmatpush1.msra.mxu0 0.0
      %943 = vmatprep.subr.mxu0 0.0
      %944 = vmatpush1.msra.mxu0 0.0
      %945 = vmatprep.subr.mxu0 0.0
      %946 = vmatpush1.msra.mxu0 0.0
      %947 = vmatprep.mubr.f32.mxu0 0.0
      %v948 = vand.u32 %v800, 4294901760
      %949 = vmatmul.mubr.f32.gmra.mrb[0].mxu0 %v948
      %v950 = vpop.f32.mrb[0].mxu0
      %v951 = vadd.f32 %v875, %v950
      %v952 = vpop.f32.mrb[0].mxu0
      %953 = vdwg.mxu0
      %954 = vmatprep.subr.mxu0 0.0
      %v955 = vand.u32 %v790, 4294901760
      %v956 = vsub.f32 %v790, %v955
      %957 = vmatpush1.msra.mxu0 %v956
      %958 = vmatprep.subr.mxu0 0.0
      %959 = vmatpush1.msra.mxu0 0.0
      %960 = vmatprep.subr.mxu0 0.0
      %961 = vmatpush1.msra.mxu0 0.0
      %962 = vmatprep.subr.mxu0 0.0
      %963 = vmatpush1.msra.mxu0 0.0
      %964 = vmatprep.subr.mxu0 0.0
      %965 = vmatpush1.msra.mxu0 0.0
      %966 = vmatprep.subr.mxu0 0.0
      %967 = vmatpush1.msra.mxu0 0.0
      %968 = vmatprep.subr.mxu0 0.0
      %969 = vmatpush1.msra.mxu0 0.0
      %970 = vmatprep.subr.mxu0 0.0
      %971 = vmatpush1.msra.mxu0 0.0
      %972 = vmatprep.subr.mxu0 0.0
      %973 = vmatpush1.msra.mxu0 0.0
      %974 = vmatprep.subr.mxu0 0.0
      %975 = vmatpush1.msra.mxu0 0.0
      %976 = vmatprep.subr.mxu0 0.0
      %977 = vmatpush1.msra.mxu0 0.0
      %978 = vmatprep.subr.mxu0 0.0
      %979 = vmatpush1.msra.mxu0 0.0
      %980 = vmatprep.subr.mxu0 0.0
      %981 = vmatpush1.msra.mxu0 0.0
      %982 = vmatprep.subr.mxu0 0.0
      %983 = vmatpush1.msra.mxu0 0.0
      %984 = vmatprep.subr.mxu0 0.0
      %985 = vmatpush1.msra.mxu0 0.0
      %986 = vmatprep.subr.mxu0 0.0
      %987 = vmatpush1.msra.mxu0 0.0
      %988 = vmatprep.subr.mxu0 0.0
      %989 = vmatpush1.msra.mxu0 0.0
      %990 = vmatprep.subr.mxu0 0.0
      %991 = vmatpush1.msra.mxu0 0.0
      %992 = vmatprep.subr.mxu0 0.0
      %993 = vmatpush1.msra.mxu0 0.0
      %994 = vmatprep.subr.mxu0 0.0
      %995 = vmatpush1.msra.mxu0 0.0
      %996 = vmatprep.subr.mxu0 0.0
      %997 = vmatpush1.msra.mxu0 0.0
      %998 = vmatprep.subr.mxu0 0.0
      %999 = vmatpush1.msra.mxu0 0.0
      %1000 = vmatprep.subr.mxu0 0.0
      %1001 = vmatpush1.msra.mxu0 0.0
      %1002 = vmatprep.subr.mxu0 0.0
      %1003 = vmatpush1.msra.mxu0 0.0
      %1004 = vmatprep.subr.mxu0 0.0
      %1005 = vmatpush1.msra.mxu0 0.0
      %1006 = vmatprep.subr.mxu0 0.0
      %1007 = vmatpush1.msra.mxu0 0.0
      %1008 = vmatprep.subr.mxu0 0.0
      %1009 = vmatpush1.msra.mxu0 0.0
      %1010 = vmatprep.subr.mxu0 0.0
      %1011 = vmatpush1.msra.mxu0 0.0
      %1012 = vmatprep.subr.mxu0 0.0
      %1013 = vmatpush1.msra.mxu0 0.0
      %1014 = vmatprep.subr.mxu0 0.0
      %1015 = vmatpush1.msra.mxu0 0.0
      %1016 = vmatprep.subr.mxu0 0.0
      %1017 = vmatpush1.msra.mxu0 0.0
      %1018 = vmatprep.subr.mxu0 0.0
      %1019 = vmatpush1.msra.mxu0 0.0
      %1020 = vmatprep.mubr.f32.mxu0 0.0
      %v1021 = vand.u32 %v800, 4294901760
      %v1022 = vsub.f32 %v800, %v1021
      %1023 = vmatmul.mubr.f32.gmra.mrb[0].mxu0 %v1022
      %v1024 = vpop.f32.mrb[0].mxu0
      %v1025 = vadd.f32 %v951, %v1024
      %v1026 = vpop.f32.mrb[0].mxu0
      %1027 = vdwg.mxu0
      %1028 = vmatprep.subr.mxu0 0.0
      %v1029 = vand.u32 %v790, 4294901760
      %1030 = vmatpush1.msra.mxu0 %v1029
      %1031 = vmatprep.subr.mxu0 0.0
      %1032 = vmatpush1.msra.mxu0 0.0
      %1033 = vmatprep.subr.mxu0 0.0
      %1034 = vmatpush1.msra.mxu0 0.0
      %1035 = vmatprep.subr.mxu0 0.0
      %1036 = vmatpush1.msra.mxu0 0.0
      %1037 = vmatprep.subr.mxu0 0.0
      %1038 = vmatpush1.msra.mxu0 0.0
      %1039 = vmatprep.subr.mxu0 0.0
      %1040 = vmatpush1.msra.mxu0 0.0
      %1041 = vmatprep.subr.mxu0 0.0
      %1042 = vmatpush1.msra.mxu0 0.0
      %1043 = vmatprep.subr.mxu0 0.0
      %1044 = vmatpush1.msra.mxu0 0.0
      %1045 = vmatprep.subr.mxu0 0.0
      %1046 = vmatpush1.msra.mxu0 0.0
      %1047 = vmatprep.subr.mxu0 0.0
      %1048 = vmatpush1.msra.mxu0 0.0
      %1049 = vmatprep.subr.mxu0 0.0
      %1050 = vmatpush1.msra.mxu0 0.0
      %1051 = vmatprep.subr.mxu0 0.0
      %1052 = vmatpush1.msra.mxu0 0.0
      %1053 = vmatprep.subr.mxu0 0.0
      %1054 = vmatpush1.msra.mxu0 0.0
      %1055 = vmatprep.subr.mxu0 0.0
      %1056 = vmatpush1.msra.mxu0 0.0
      %1057 = vmatprep.subr.mxu0 0.0
      %1058 = vmatpush1.msra.mxu0 0.0
      %1059 = vmatprep.subr.mxu0 0.0
      %1060 = vmatpush1.msra.mxu0 0.0
      %1061 = vmatprep.subr.mxu0 0.0
      %1062 = vmatpush1.msra.mxu0 0.0
      %1063 = vmatprep.subr.mxu0 0.0
      %1064 = vmatpush1.msra.mxu0 0.0
      %1065 = vmatprep.subr.mxu0 0.0
      %1066 = vmatpush1.msra.mxu0 0.0
      %1067 = vmatprep.subr.mxu0 0.0
      %1068 = vmatpush1.msra.mxu0 0.0
      %1069 = vmatprep.subr.mxu0 0.0
      %1070 = vmatpush1.msra.mxu0 0.0
      %1071 = vmatprep.subr.mxu0 0.0
      %1072 = vmatpush1.msra.mxu0 0.0
      %1073 = vmatprep.subr.mxu0 0.0
      %1074 = vmatpush1.msra.mxu0 0.0
      %1075 = vmatprep.subr.mxu0 0.0
      %1076 = vmatpush1.msra.mxu0 0.0
      %1077 = vmatprep.subr.mxu0 0.0
      %1078 = vmatpush1.msra.mxu0 0.0
      %1079 = vmatprep.subr.mxu0 0.0
      %1080 = vmatpush1.msra.mxu0 0.0
      %1081 = vmatprep.subr.mxu0 0.0
      %1082 = vmatpush1.msra.mxu0 0.0
      %1083 = vmatprep.subr.mxu0 0.0
      %1084 = vmatpush1.msra.mxu0 0.0
      %1085 = vmatprep.subr.mxu0 0.0
      %1086 = vmatpush1.msra.mxu0 0.0
      %1087 = vmatprep.subr.mxu0 0.0
      %1088 = vmatpush1.msra.mxu0 0.0
      %1089 = vmatprep.subr.mxu0 0.0
      %1090 = vmatpush1.msra.mxu0 0.0
      %1091 = vmatprep.subr.mxu0 0.0
      %1092 = vmatpush1.msra.mxu0 0.0
      %1093 = vmatprep.mubr.f32.mxu0 0.0
      %v1094 = vand.u32 %v800, 4294901760
      %v1095 = vsub.f32 %v800, %v1094
      %v1096 = vand.u32 %v1095, 4294901760
      %1097 = vmatmul.mubr.f32.gmra.mrb[0].mxu0 %v1096
      %v1098 = vpop.f32.mrb[0].mxu0
      %v1099 = vadd.f32 %v1025, %v1098
      %v1100 = vpop.f32.mrb[0].mxu0
      %1101 = vdwg.mxu0
      %1102 = vmatprep.subr.mxu0 0.0
      %v1103 = vand.u32 %v790, 4294901760
      %v1104 = vsub.f32 %v790, %v1103
      %v1105 = vand.u32 %v1104, 4294901760
      %1106 = vmatpush1.msra.mxu0 %v1105
      %1107 = vmatprep.subr.mxu0 0.0
      %1108 = vmatpush1.msra.mxu0 0.0
      %1109 = vmatprep.subr.mxu0 0.0
      %1110 = vmatpush1.msra.mxu0 0.0
      %1111 = vmatprep.subr.mxu0 0.0
      %1112 = vmatpush1.msra.mxu0 0.0
      %1113 = vmatprep.subr.mxu0 0.0
      %1114 = vmatpush1.msra.mxu0 0.0
      %1115 = vmatprep.subr.mxu0 0.0
      %1116 = vmatpush1.msra.mxu0 0.0
      %1117 = vmatprep.subr.mxu0 0.0
      %1118 = vmatpush1.msra.mxu0 0.0
      %1119 = vmatprep.subr.mxu0 0.0
      %1120 = vmatpush1.msra.mxu0 0.0
      %1121 = vmatprep.subr.mxu0 0.0
      %1122 = vmatpush1.msra.mxu0 0.0
      %1123 = vmatprep.subr.mxu0 0.0
      %1124 = vmatpush1.msra.mxu0 0.0
      %1125 = vmatprep.subr.mxu0 0.0
      %1126 = vmatpush1.msra.mxu0 0.0
      %1127 = vmatprep.subr.mxu0 0.0
      %1128 = vmatpush1.msra.mxu0 0.0
      %1129 = vmatprep.subr.mxu0 0.0
      %1130 = vmatpush1.msra.mxu0 0.0
      %1131 = vmatprep.subr.mxu0 0.0
      %1132 = vmatpush1.msra.mxu0 0.0
      %1133 = vmatprep.subr.mxu0 0.0
      %1134 = vmatpush1.msra.mxu0 0.0
      %1135 = vmatprep.subr.mxu0 0.0
      %1136 = vmatpush1.msra.mxu0 0.0
      %1137 = vmatprep.subr.mxu0 0.0
      %1138 = vmatpush1.msra.mxu0 0.0
      %1139 = vmatprep.subr.mxu0 0.0
      %1140 = vmatpush1.msra.mxu0 0.0
      %1141 = vmatprep.subr.mxu0 0.0
      %1142 = vmatpush1.msra.mxu0 0.0
      %1143 = vmatprep.subr.mxu0 0.0
      %1144 = vmatpush1.msra.mxu0 0.0
      %1145 = vmatprep.subr.mxu0 0.0
      %1146 = vmatpush1.msra.mxu0 0.0
      %1147 = vmatprep.subr.mxu0 0.0
      %1148 = vmatpush1.msra.mxu0 0.0
      %1149 = vmatprep.subr.mxu0 0.0
      %1150 = vmatpush1.msra.mxu0 0.0
      %1151 = vmatprep.subr.mxu0 0.0
      %1152 = vmatpush1.msra.mxu0 0.0
      %1153 = vmatprep.subr.mxu0 0.0
      %1154 = vmatpush1.msra.mxu0 0.0
      %1155 = vmatprep.subr.mxu0 0.0
      %1156 = vmatpush1.msra.mxu0 0.0
      %1157 = vmatprep.subr.mxu0 0.0
      %1158 = vmatpush1.msra.mxu0 0.0
      %1159 = vmatprep.subr.mxu0 0.0
      %1160 = vmatpush1.msra.mxu0 0.0
      %1161 = vmatprep.subr.mxu0 0.0
      %1162 = vmatpush1.msra.mxu0 0.0
      %1163 = vmatprep.subr.mxu0 0.0
      %1164 = vmatpush1.msra.mxu0 0.0
      %1165 = vmatprep.subr.mxu0 0.0
      %1166 = vmatpush1.msra.mxu0 0.0
      %1167 = vmatprep.subr.mxu0 0.0
      %1168 = vmatpush1.msra.mxu0 0.0
      %1169 = vmatprep.mubr.f32.mxu0 0.0
      %v1170 = vand.u32 %v800, 4294901760
      %1171 = vmatmul.mubr.f32.gmra.mrb[0].mxu0 %v1170
      %v1172 = vpop.f32.mrb[0].mxu0
      %v1173 = vadd.f32 %v1099, %v1172
      %v1174 = vpop.f32.mrb[0].mxu0
      %1175 = vdwg.mxu0
      %1176 = vmatprep.subr.mxu0 0.0
      %v1177 = vand.u32 %v790, 4294901760
      %1178 = vmatpush1.msra.mxu0 %v1177
      %1179 = vmatprep.subr.mxu0 0.0
      %1180 = vmatpush1.msra.mxu0 0.0
      %1181 = vmatprep.subr.mxu0 0.0
      %1182 = vmatpush1.msra.mxu0 0.0
      %1183 = vmatprep.subr.mxu0 0.0
      %1184 = vmatpush1.msra.mxu0 0.0
      %1185 = vmatprep.subr.mxu0 0.0
      %1186 = vmatpush1.msra.mxu0 0.0
      %1187 = vmatprep.subr.mxu0 0.0
      %1188 = vmatpush1.msra.mxu0 0.0
      %1189 = vmatprep.subr.mxu0 0.0
      %1190 = vmatpush1.msra.mxu0 0.0
      %1191 = vmatprep.subr.mxu0 0.0
      %1192 = vmatpush1.msra.mxu0 0.0
      %1193 = vmatprep.subr.mxu0 0.0
      %1194 = vmatpush1.msra.mxu0 0.0
      %1195 = vmatprep.subr.mxu0 0.0
      %1196 = vmatpush1.msra.mxu0 0.0
      %1197 = vmatprep.subr.mxu0 0.0
      %1198 = vmatpush1.msra.mxu0 0.0
      %1199 = vmatprep.subr.mxu0 0.0
      %1200 = vmatpush1.msra.mxu0 0.0
      %1201 = vmatprep.subr.mxu0 0.0
      %1202 = vmatpush1.msra.mxu0 0.0
      %1203 = vmatprep.subr.mxu0 0.0
      %1204 = vmatpush1.msra.mxu0 0.0
      %1205 = vmatprep.subr.mxu0 0.0
      %1206 = vmatpush1.msra.mxu0 0.0
      %1207 = vmatprep.subr.mxu0 0.0
      %1208 = vmatpush1.msra.mxu0 0.0
      %1209 = vmatprep.subr.mxu0 0.0
      %1210 = vmatpush1.msra.mxu0 0.0
      %1211 = vmatprep.subr.mxu0 0.0
      %1212 = vmatpush1.msra.mxu0 0.0
      %1213 = vmatprep.subr.mxu0 0.0
      %1214 = vmatpush1.msra.mxu0 0.0
      %1215 = vmatprep.subr.mxu0 0.0
      %1216 = vmatpush1.msra.mxu0 0.0
      %1217 = vmatprep.subr.mxu0 0.0
      %1218 = vmatpush1.msra.mxu0 0.0
      %1219 = vmatprep.subr.mxu0 0.0
      %1220 = vmatpush1.msra.mxu0 0.0
      %1221 = vmatprep.subr.mxu0 0.0
      %1222 = vmatpush1.msra.mxu0 0.0
      %1223 = vmatprep.subr.mxu0 0.0
      %1224 = vmatpush1.msra.mxu0 0.0
      %1225 = vmatprep.subr.mxu0 0.0
      %1226 = vmatpush1.msra.mxu0 0.0
      %1227 = vmatprep.subr.mxu0 0.0
      %1228 = vmatpush1.msra.mxu0 0.0
      %1229 = vmatprep.subr.mxu0 0.0
      %1230 = vmatpush1.msra.mxu0 0.0
      %1231 = vmatprep.subr.mxu0 0.0
      %1232 = vmatpush1.msra.mxu0 0.0
      %1233 = vmatprep.subr.mxu0 0.0
      %1234 = vmatpush1.msra.mxu0 0.0
      %1235 = vmatprep.subr.mxu0 0.0
      %1236 = vmatpush1.msra.mxu0 0.0
      %1237 = vmatprep.subr.mxu0 0.0
      %1238 = vmatpush1.msra.mxu0 0.0
      %1239 = vmatprep.subr.mxu0 0.0
      %1240 = vmatpush1.msra.mxu0 0.0
      %1241 = vmatprep.mubr.f32.mxu0 0.0
      %v1242 = vand.u32 %v800, 4294901760
      %1243 = vmatmul.mubr.f32.gmra.mrb[0].mxu0 %v1242
      %v1244 = vpop.f32.mrb[0].mxu0
      %v1245 = vadd.f32 %v1173, %v1244
      %v1246 = vpop.f32.mrb[0].mxu0
      %1247 = vdwg.mxu0
      %v1248 = vtanh.pop %v1245
      %v1249 = vld [vmem:[%s5] sm:$0xff]
      %v1250 = vld [vmem:[%s6] sm:$0xff]
      %1252 = vset.pattern.permute.xlu0 0
      %1253 = vperm.xlu0 %1252, %v1250
      %v1254 = vpop.permute.xlu0 %1253
      %v1257 = vsel %vm798, %v1249, 0
      %1259 = vmatprep.subr.mxu0 0.0
      %v1260 = vand.u32 %v1248, 4294901760
      %1261 = vmatpush1.msra.mxu0 %v1260
      %1262 = vmatprep.subr.mxu0 0.0
      %1263 = vmatpush1.msra.mxu0 0.0
      %1264 = vmatprep.subr.mxu0 0.0
      %1265 = vmatpush1.msra.mxu0 0.0
      %1266 = vmatprep.subr.mxu0 0.0
      %1267 = vmatpush1.msra.mxu0 0.0
      %1268 = vmatprep.subr.mxu0 0.0
      %1269 = vmatpush1.msra.mxu0 0.0
      %1270 = vmatprep.subr.mxu0 0.0
      %1271 = vmatpush1.msra.mxu0 0.0
      %1272 = vmatprep.subr.mxu0 0.0
      %1273 = vmatpush1.msra.mxu0 0.0
      %1274 = vmatprep.subr.mxu0 0.0
      %1275 = vmatpush1.msra.mxu0 0.0
      %1276 = vmatprep.subr.mxu0 0.0
      %1277 = vmatpush1.msra.mxu0 0.0
      %1278 = vmatprep.subr.mxu0 0.0
      %1279 = vmatpush1.msra.mxu0 0.0
      %1280 = vmatprep.subr.mxu0 0.0
      %1281 = vmatpush1.msra.mxu0 0.0
      %1282 = vmatprep.subr.mxu0 0.0
      %1283 = vmatpush1.msra.mxu0 0.0
      %1284 = vmatprep.subr.mxu0 0.0
      %1285 = vmatpush1.msra.mxu0 0.0
      %1286 = vmatprep.subr.mxu0 0.0
      %1287 = vmatpush1.msra.mxu0 0.0
      %1288 = vmatprep.subr.mxu0 0.0
      %1289 = vmatpush1.msra.mxu0 0.0
      %1290 = vmatprep.subr.mxu0 0.0
      %1291 = vmatpush1.msra.mxu0 0.0
      %1292 = vmatprep.subr.mxu0 0.0
      %1293 = vmatpush1.msra.mxu0 0.0
      %1294 = vmatprep.subr.mxu0 0.0
      %1295 = vmatpush1.msra.mxu0 0.0
      %1296 = vmatprep.subr.mxu0 0.0
      %1297 = vmatpush1.msra.mxu0 0.0
      %1298 = vmatprep.subr.mxu0 0.0
      %1299 = vmatpush1.msra.mxu0 0.0
      %1300 = vmatprep.subr.mxu0 0.0
      %1301 = vmatpush1.msra.mxu0 0.0
      %1302 = vmatprep.subr.mxu0 0.0
      %1303 = vmatpush1.msra.mxu0 0.0
      %1304 = vmatprep.subr.mxu0 0.0
      %1305 = vmatpush1.msra.mxu0 0.0
      %1306 = vmatprep.subr.mxu0 0.0
      %1307 = vmatpush1.msra.mxu0 0.0
      %1308 = vmatprep.subr.mxu0 0.0
      %1309 = vmatpush1.msra.mxu0 0.0
      %1310 = vmatprep.subr.mxu0 0.0
      %1311 = vmatpush1.msra.mxu0 0.0
      %1312 = vmatprep.subr.mxu0 0.0
      %1313 = vmatpush1.msra.mxu0 0.0
      %1314 = vmatprep.subr.mxu0 0.0
      %1315 = vmatpush1.msra.mxu0 0.0
      %1316 = vmatprep.subr.mxu0 0.0
      %1317 = vmatpush1.msra.mxu0 0.0
      %1318 = vmatprep.subr.mxu0 0.0
      %1319 = vmatpush1.msra.mxu0 0.0
      %1320 = vmatprep.subr.mxu0 0.0
      %1321 = vmatpush1.msra.mxu0 0.0
      %1322 = vmatprep.subr.mxu0 0.0
      %1323 = vmatpush1.msra.mxu0 0.0
      %1324 = vmatprep.mubr.f32.mxu0 0.0
      %v1325 = vand.u32 %v1257, 4294901760
      %v1326 = vsub.f32 %v1257, %v1325
      %v1327 = vand.u32 %v1326, 4294901760
      %v1328 = vsub.f32 %v1326, %v1327
      %v1329 = vand.u32 %v1328, 4294901760
      %1330 = vmatmul.mubr.f32.gmra.mrb[0].mxu0 %v1329
      %v1331 = vpop.f32.mrb[0].mxu0
      %v1332 = vadd.f32 %v1254, %v1331
      %v1333 = vpop.f32.mrb[0].mxu0
      %1334 = vdwg.mxu0
      %1335 = vmatprep.subr.mxu0 0.0
      %v1336 = vand.u32 %v1248, 4294901760
      %v1337 = vsub.f32 %v1248, %v1336
      %v1338 = vand.u32 %v1337, 4294901760
      %v1339 = vsub.f32 %v1337, %v1338
      %v1340 = vand.u32 %v1339, 4294901760
      %1341 = vmatpush1.msra.mxu0 %v1340
      %1342 = vmatprep.subr.mxu0 0.0
      %1343 = vmatpush1.msra.mxu0 0.0
      %1344 = vmatprep.subr.mxu0 0.0
      %1345 = vmatpush1.msra.mxu0 0.0
      %1346 = vmatprep.subr.mxu0 0.0
      %1347 = vmatpush1.msra.mxu0 0.0
      %1348 = vmatprep.subr.mxu0 0.0
      %1349 = vmatpush1.msra.mxu0 0.0
      %1350 = vmatprep.subr.mxu0 0.0
      %1351 = vmatpush1.msra.mxu0 0.0
      %1352 = vmatprep.subr.mxu0 0.0
      %1353 = vmatpush1.msra.mxu0 0.0
      %1354 = vmatprep.subr.mxu0 0.0
      %1355 = vmatpush1.msra.mxu0 0.0
      %1356 = vmatprep.subr.mxu0 0.0
      %1357 = vmatpush1.msra.mxu0 0.0
      %1358 = vmatprep.subr.mxu0 0.0
      %1359 = vmatpush1.msra.mxu0 0.0
      %1360 = vmatprep.subr.mxu0 0.0
      %1361 = vmatpush1.msra.mxu0 0.0
      %1362 = vmatprep.subr.mxu0 0.0
      %1363 = vmatpush1.msra.mxu0 0.0
      %1364 = vmatprep.subr.mxu0 0.0
      %1365 = vmatpush1.msra.mxu0 0.0
      %1366 = vmatprep.subr.mxu0 0.0
      %1367 = vmatpush1.msra.mxu0 0.0
      %1368 = vmatprep.subr.mxu0 0.0
      %1369 = vmatpush1.msra.mxu0 0.0
      %1370 = vmatprep.subr.mxu0 0.0
      %1371 = vmatpush1.msra.mxu0 0.0
      %1372 = vmatprep.subr.mxu0 0.0
      %1373 = vmatpush1.msra.mxu0 0.0
      %1374 = vmatprep.subr.mxu0 0.0
      %1375 = vmatpush1.msra.mxu0 0.0
      %1376 = vmatprep.subr.mxu0 0.0
      %1377 = vmatpush1.msra.mxu0 0.0
      %1378 = vmatprep.subr.mxu0 0.0
      %1379 = vmatpush1.msra.mxu0 0.0
      %1380 = vmatprep.subr.mxu0 0.0
      %1381 = vmatpush1.msra.mxu0 0.0
      %1382 = vmatprep.subr.mxu0 0.0
      %1383 = vmatpush1.msra.mxu0 0.0
      %1384 = vmatprep.subr.mxu0 0.0
      %1385 = vmatpush1.msra.mxu0 0.0
      %1386 = vmatprep.subr.mxu0 0.0
      %1387 = vmatpush1.msra.mxu0 0.0
      %1388 = vmatprep.subr.mxu0 0.0
      %1389 = vmatpush1.msra.mxu0 0.0
      %1390 = vmatprep.subr.mxu0 0.0
      %1391 = vmatpush1.msra.mxu0 0.0
      %1392 = vmatprep.subr.mxu0 0.0
      %1393 = vmatpush1.msra.mxu0 0.0
      %1394 = vmatprep.subr.mxu0 0.0
      %1395 = vmatpush1.msra.mxu0 0.0
      %1396 = vmatprep.subr.mxu0 0.0
      %1397 = vmatpush1.msra.mxu0 0.0
      %1398 = vmatprep.subr.mxu0 0.0
      %1399 = vmatpush1.msra.mxu0 0.0
      %1400 = vmatprep.subr.mxu0 0.0
      %1401 = vmatpush1.msra.mxu0 0.0
      %1402 = vmatprep.subr.mxu0 0.0
      %1403 = vmatpush1.msra.mxu0 0.0
      %1404 = vmatprep.mubr.f32.mxu0 0.0
      %v1405 = vand.u32 %v1257, 4294901760
      %1406 = vmatmul.mubr.f32.gmra.mrb[0].mxu0 %v1405
      %v1407 = vpop.f32.mrb[0].mxu0
      %v1408 = vadd.f32 %v1332, %v1407
      %v1409 = vpop.f32.mrb[0].mxu0
      %1410 = vdwg.mxu0
      %1411 = vmatprep.subr.mxu0 0.0
      %v1412 = vand.u32 %v1248, 4294901760
      %v1413 = vsub.f32 %v1248, %v1412
      %1414 = vmatpush1.msra.mxu0 %v1413
      %1415 = vmatprep.subr.mxu0 0.0
      %1416 = vmatpush1.msra.mxu0 0.0
      %1417 = vmatprep.subr.mxu0 0.0
      %1418 = vmatpush1.msra.mxu0 0.0
      %1419 = vmatprep.subr.mxu0 0.0
      %1420 = vmatpush1.msra.mxu0 0.0
      %1421 = vmatprep.subr.mxu0 0.0
      %1422 = vmatpush1.msra.mxu0 0.0
      %1423 = vmatprep.subr.mxu0 0.0
      %1424 = vmatpush1.msra.mxu0 0.0
      %1425 = vmatprep.subr.mxu0 0.0
      %1426 = vmatpush1.msra.mxu0 0.0
      %1427 = vmatprep.subr.mxu0 0.0
      %1428 = vmatpush1.msra.mxu0 0.0
      %1429 = vmatprep.subr.mxu0 0.0
      %1430 = vmatpush1.msra.mxu0 0.0
      %1431 = vmatprep.subr.mxu0 0.0
      %1432 = vmatpush1.msra.mxu0 0.0
      %1433 = vmatprep.subr.mxu0 0.0
      %1434 = vmatpush1.msra.mxu0 0.0
      %1435 = vmatprep.subr.mxu0 0.0
      %1436 = vmatpush1.msra.mxu0 0.0
      %1437 = vmatprep.subr.mxu0 0.0
      %1438 = vmatpush1.msra.mxu0 0.0
      %1439 = vmatprep.subr.mxu0 0.0
      %1440 = vmatpush1.msra.mxu0 0.0
      %1441 = vmatprep.subr.mxu0 0.0
      %1442 = vmatpush1.msra.mxu0 0.0
      %1443 = vmatprep.subr.mxu0 0.0
      %1444 = vmatpush1.msra.mxu0 0.0
      %1445 = vmatprep.subr.mxu0 0.0
      %1446 = vmatpush1.msra.mxu0 0.0
      %1447 = vmatprep.subr.mxu0 0.0
      %1448 = vmatpush1.msra.mxu0 0.0
      %1449 = vmatprep.subr.mxu0 0.0
      %1450 = vmatpush1.msra.mxu0 0.0
      %1451 = vmatprep.subr.mxu0 0.0
      %1452 = vmatpush1.msra.mxu0 0.0
      %1453 = vmatprep.subr.mxu0 0.0
      %1454 = vmatpush1.msra.mxu0 0.0
      %1455 = vmatprep.subr.mxu0 0.0
      %1456 = vmatpush1.msra.mxu0 0.0
      %1457 = vmatprep.subr.mxu0 0.0
      %1458 = vmatpush1.msra.mxu0 0.0
      %1459 = vmatprep.subr.mxu0 0.0
      %1460 = vmatpush1.msra.mxu0 0.0
      %1461 = vmatprep.subr.mxu0 0.0
      %1462 = vmatpush1.msra.mxu0 0.0
      %1463 = vmatprep.subr.mxu0 0.0
      %1464 = vmatpush1.msra.mxu0 0.0
      %1465 = vmatprep.subr.mxu0 0.0
      %1466 = vmatpush1.msra.mxu0 0.0
      %1467 = vmatprep.subr.mxu0 0.0
      %1468 = vmatpush1.msra.mxu0 0.0
      %1469 = vmatprep.subr.mxu0 0.0
      %1470 = vmatpush1.msra.mxu0 0.0
      %1471 = vmatprep.subr.mxu0 0.0
      %1472 = vmatpush1.msra.mxu0 0.0
      %1473 = vmatprep.subr.mxu0 0.0
      %1474 = vmatpush1.msra.mxu0 0.0
      %1475 = vmatprep.subr.mxu0 0.0
      %1476 = vmatpush1.msra.mxu0 0.0
      %1477 = vmatprep.mubr.f32.mxu0 0.0
      %v1478 = vand.u32 %v1257, 4294901760
      %v1479 = vsub.f32 %v1257, %v1478
      %1480 = vmatmul.mubr.f32.gmra.mrb[0].mxu0 %v1479
      %v1481 = vpop.f32.mrb[0].mxu0
      %v1482 = vadd.f32 %v1408, %v1481
      %v1483 = vpop.f32.mrb[0].mxu0
      %1484 = vdwg.mxu0
      %1485 = vmatprep.subr.mxu0 0.0
      %v1486 = vand.u32 %v1248, 4294901760
      %1487 = vmatpush1.msra.mxu0 %v1486
      %1488 = vmatprep.subr.mxu0 0.0
      %1489 = vmatpush1.msra.mxu0 0.0
      %1490 = vmatprep.subr.mxu0 0.0
      %1491 = vmatpush1.msra.mxu0 0.0
      %1492 = vmatprep.subr.mxu0 0.0
      %1493 = vmatpush1.msra.mxu0 0.0
      %1494 = vmatprep.subr.mxu0 0.0
      %1495 = vmatpush1.msra.mxu0 0.0
      %1496 = vmatprep.subr.mxu0 0.0
      %1497 = vmatpush1.msra.mxu0 0.0
      %1498 = vmatprep.subr.mxu0 0.0
      %1499 = vmatpush1.msra.mxu0 0.0
      %1500 = vmatprep.subr.mxu0 0.0
      %1501 = vmatpush1.msra.mxu0 0.0
      %1502 = vmatprep.subr.mxu0 0.0
      %1503 = vmatpush1.msra.mxu0 0.0
      %1504 = vmatprep.subr.mxu0 0.0
      %1505 = vmatpush1.msra.mxu0 0.0
      %1506 = vmatprep.subr.mxu0 0.0
      %1507 = vmatpush1.msra.mxu0 0.0
      %1508 = vmatprep.subr.mxu0 0.0
      %1509 = vmatpush1.msra.mxu0 0.0
      %1510 = vmatprep.subr.mxu0 0.0
      %1511 = vmatpush1.msra.mxu0 0.0
      %1512 = vmatprep.subr.mxu0 0.0
      %1513 = vmatpush1.msra.mxu0 0.0
      %1514 = vmatprep.subr.mxu0 0.0
      %1515 = vmatpush1.msra.mxu0 0.0
      %1516 = vmatprep.subr.mxu0 0.0
      %1517 = vmatpush1.msra.mxu0 0.0
      %1518 = vmatprep.subr.mxu0 0.0
      %1519 = vmatpush1.msra.mxu0 0.0
      %1520 = vmatprep.subr.mxu0 0.0
      %1521 = vmatpush1.msra.mxu0 0.0
      %1522 = vmatprep.subr.mxu0 0.0
      %1523 = vmatpush1.msra.mxu0 0.0
      %1524 = vmatprep.subr.mxu0 0.0
      %1525 = vmatpush1.msra.mxu0 0.0
      %1526 = vmatprep.subr.mxu0 0.0
      %1527 = vmatpush1.msra.mxu0 0.0
      %1528 = vmatprep.subr.mxu0 0.0
      %1529 = vmatpush1.msra.mxu0 0.0
      %1530 = vmatprep.subr.mxu0 0.0
      %1531 = vmatpush1.msra.mxu0 0.0
      %1532 = vmatprep.subr.mxu0 0.0
      %1533 = vmatpush1.msra.mxu0 0.0
      %1534 = vmatprep.subr.mxu0 0.0
      %1535 = vmatpush1.msra.mxu0 0.0
      %1536 = vmatprep.subr.mxu0 0.0
      %1537 = vmatpush1.msra.mxu0 0.0
      %1538 = vmatprep.subr.mxu0 0.0
      %1539 = vmatpush1.msra.mxu0 0.0
      %1540 = vmatprep.subr.mxu0 0.0
      %1541 = vmatpush1.msra.mxu0 0.0
      %1542 = vmatprep.subr.mxu0 0.0
      %1543 = vmatpush1.msra.mxu0 0.0
      %1544 = vmatprep.subr.mxu0 0.0
      %1545 = vmatpush1.msra.mxu0 0.0
      %1546 = vmatprep.subr.mxu0 0.0
      %1547 = vmatpush1.msra.mxu0 0.0
      %1548 = vmatprep.subr.mxu0 0.0
      %1549 = vmatpush1.msra.mxu0 0.0
      %1550 = vmatprep.mubr.f32.mxu0 0.0
      %v1551 = vand.u32 %v1257, 4294901760
      %v1552 = vsub.f32 %v1257, %v1551
      %v1553 = vand.u32 %v1552, 4294901760
      %1554 = vmatmul.mubr.f32.gmra.mrb[0].mxu0 %v1553
      %v1555 = vpop.f32.mrb[0].mxu0
      %v1556 = vadd.f32 %v1482, %v1555
      %v1557 = vpop.f32.mrb[0].mxu0
      %1558 = vdwg.mxu0
      %1559 = vmatprep.subr.mxu0 0.0
      %v1560 = vand.u32 %v1248, 4294901760
      %v1561 = vsub.f32 %v1248, %v1560
      %v1562 = vand.u32 %v1561, 4294901760
      %1563 = vmatpush1.msra.mxu0 %v1562
      %1564 = vmatprep.subr.mxu0 0.0
      %1565 = vmatpush1.msra.mxu0 0.0
      %1566 = vmatprep.subr.mxu0 0.0
      %1567 = vmatpush1.msra.mxu0 0.0
      %1568 = vmatprep.subr.mxu0 0.0
      %1569 = vmatpush1.msra.mxu0 0.0
      %1570 = vmatprep.subr.mxu0 0.0
      %1571 = vmatpush1.msra.mxu0 0.0
      %1572 = vmatprep.subr.mxu0 0.0
      %1573 = vmatpush1.msra.mxu0 0.0
      %1574 = vmatprep.subr.mxu0 0.0
      %1575 = vmatpush1.msra.mxu0 0.0
      %1576 = vmatprep.subr.mxu0 0.0
      %1577 = vmatpush1.msra.mxu0 0.0
      %1578 = vmatprep.subr.mxu0 0.0
      %1579 = vmatpush1.msra.mxu0 0.0
      %1580 = vmatprep.subr.mxu0 0.0
      %1581 = vmatpush1.msra.mxu0 0.0
      %1582 = vmatprep.subr.mxu0 0.0
      %1583 = vmatpush1.msra.mxu0 0.0
      %1584 = vmatprep.subr.mxu0 0.0
      %1585 = vmatpush1.msra.mxu0 0.0
      %1586 = vmatprep.subr.mxu0 0.0
      %1587 = vmatpush1.msra.mxu0 0.0
      %1588 = vmatprep.subr.mxu0 0.0
      %1589 = vmatpush1.msra.mxu0 0.0
      %1590 = vmatprep.subr.mxu0 0.0
      %1591 = vmatpush1.msra.mxu0 0.0
      %1592 = vmatprep.subr.mxu0 0.0
      %1593 = vmatpush1.msra.mxu0 0.0
      %1594 = vmatprep.subr.mxu0 0.0
      %1595 = vmatpush1.msra.mxu0 0.0
      %1596 = vmatprep.subr.mxu0 0.0
      %1597 = vmatpush1.msra.mxu0 0.0
      %1598 = vmatprep.subr.mxu0 0.0
      %1599 = vmatpush1.msra.mxu0 0.0
      %1600 = vmatprep.subr.mxu0 0.0
      %1601 = vmatpush1.msra.mxu0 0.0
      %1602 = vmatprep.subr.mxu0 0.0
      %1603 = vmatpush1.msra.mxu0 0.0
      %1604 = vmatprep.subr.mxu0 0.0
      %1605 = vmatpush1.msra.mxu0 0.0
      %1606 = vmatprep.subr.mxu0 0.0
      %1607 = vmatpush1.msra.mxu0 0.0
      %1608 = vmatprep.subr.mxu0 0.0
      %1609 = vmatpush1.msra.mxu0 0.0
      %1610 = vmatprep.subr.mxu0 0.0
      %1611 = vmatpush1.msra.mxu0 0.0
      %1612 = vmatprep.subr.mxu0 0.0
      %1613 = vmatpush1.msra.mxu0 0.0
      %1614 = vmatprep.subr.mxu0 0.0
      %1615 = vmatpush1.msra.mxu0 0.0
      %1616 = vmatprep.subr.mxu0 0.0
      %1617 = vmatpush1.msra.mxu0 0.0
      %1618 = vmatprep.subr.mxu0 0.0
      %1619 = vmatpush1.msra.mxu0 0.0
      %1620 = vmatprep.subr.mxu0 0.0
      %1621 = vmatpush1.msra.mxu0 0.0
      %1622 = vmatprep.subr.mxu0 0.0
      %1623 = vmatpush1.msra.mxu0 0.0
      %1624 = vmatprep.subr.mxu0 0.0
      %1625 = vmatpush1.msra.mxu0 0.0
      %1626 = vmatprep.mubr.f32.mxu0 0.0
      %v1627 = vand.u32 %v1257, 4294901760
      %1628 = vmatmul.mubr.f32.gmra.mrb[0].mxu0 %v1627
      %v1629 = vpop.f32.mrb[0].mxu0
      %v1630 = vadd.f32 %v1556, %v1629
      %v1631 = vpop.f32.mrb[0].mxu0
      %1632 = vdwg.mxu0
      %1633 = vmatprep.subr.mxu0 0.0
      %v1634 = vand.u32 %v1248, 4294901760
      %1635 = vmatpush1.msra.mxu0 %v1634
      %1636 = vmatprep.subr.mxu0 0.0
      %1637 = vmatpush1.msra.mxu0 0.0
      %1638 = vmatprep.subr.mxu0 0.0
      %1639 = vmatpush1.msra.mxu0 0.0
      %1640 = vmatprep.subr.mxu0 0.0
      %1641 = vmatpush1.msra.mxu0 0.0
      %1642 = vmatprep.subr.mxu0 0.0
      %1643 = vmatpush1.msra.mxu0 0.0
      %1644 = vmatprep.subr.mxu0 0.0
      %1645 = vmatpush1.msra.mxu0 0.0
      %1646 = vmatprep.subr.mxu0 0.0
      %1647 = vmatpush1.msra.mxu0 0.0
      %1648 = vmatprep.subr.mxu0 0.0
      %1649 = vmatpush1.msra.mxu0 0.0
      %1650 = vmatprep.subr.mxu0 0.0
      %1651 = vmatpush1.msra.mxu0 0.0
      %1652 = vmatprep.subr.mxu0 0.0
      %1653 = vmatpush1.msra.mxu0 0.0
      %1654 = vmatprep.subr.mxu0 0.0
      %1655 = vmatpush1.msra.mxu0 0.0
      %1656 = vmatprep.subr.mxu0 0.0
      %1657 = vmatpush1.msra.mxu0 0.0
      %1658 = vmatprep.subr.mxu0 0.0
      %1659 = vmatpush1.msra.mxu0 0.0
      %1660 = vmatprep.subr.mxu0 0.0
      %1661 = vmatpush1.msra.mxu0 0.0
      %1662 = vmatprep.subr.mxu0 0.0
      %1663 = vmatpush1.msra.mxu0 0.0
      %1664 = vmatprep.subr.mxu0 0.0
      %1665 = vmatpush1.msra.mxu0 0.0
      %1666 = vmatprep.subr.mxu0 0.0
      %1667 = vmatpush1.msra.mxu0 0.0
      %1668 = vmatprep.subr.mxu0 0.0
      %1669 = vmatpush1.msra.mxu0 0.0
      %1670 = vmatprep.subr.mxu0 0.0
      %1671 = vmatpush1.msra.mxu0 0.0
      %1672 = vmatprep.subr.mxu0 0.0
      %1673 = vmatpush1.msra.mxu0 0.0
      %1674 = vmatprep.subr.mxu0 0.0
      %1675 = vmatpush1.msra.mxu0 0.0
      %1676 = vmatprep.subr.mxu0 0.0
      %1677 = vmatpush1.msra.mxu0 0.0
      %1678 = vmatprep.subr.mxu0 0.0
      %1679 = vmatpush1.msra.mxu0 0.0
      %1680 = vmatprep.subr.mxu0 0.0
      %1681 = vmatpush1.msra.mxu0 0.0
      %1682 = vmatprep.subr.mxu0 0.0
      %1683 = vmatpush1.msra.mxu0 0.0
      %1684 = vmatprep.subr.mxu0 0.0
      %1685 = vmatpush1.msra.mxu0 0.0
      %1686 = vmatprep.subr.mxu0 0.0
      %1687 = vmatpush1.msra.mxu0 0.0
      %1688 = vmatprep.subr.mxu0 0.0
      %1689 = vmatpush1.msra.mxu0 0.0
      %1690 = vmatprep.subr.mxu0 0.0
      %1691 = vmatpush1.msra.mxu0 0.0
      %1692 = vmatprep.subr.mxu0 0.0
      %1693 = vmatpush1.msra.mxu0 0.0
      %1694 = vmatprep.subr.mxu0 0.0
      %1695 = vmatpush1.msra.mxu0 0.0
      %1696 = vmatprep.subr.mxu0 0.0
      %1697 = vmatpush1.msra.mxu0 0.0
      %1698 = vmatprep.mubr.f32.mxu0 0.0
      %v1699 = vand.u32 %v1257, 4294901760
      %1700 = vmatmul.mubr.f32.gmra.mrb[0].mxu0 %v1699
      %v1701 = vpop.f32.mrb[0].mxu0
      %v1702 = vadd.f32 %v1630, %v1701
      %v1703 = vpop.f32.mrb[0].mxu0
      %1704 = vdwg.mxu0
      %v1705 = vtanh.pop %v1702
      %v1706 = vld [vmem:[%s7] sm:$0x1]
      %v1707 = vld [vmem:[#allocation2] sm:$0x1]
      %1709 = vset.pattern.permute.xlu0 0
      %1710 = vperm.xlu0 %1709, %v1707
      %v1711 = vpop.permute.xlu0 %1710
      %v1713 = vlaneseq
      %v1714 = vshrl.u32 %v1713, 7
      %v1715 = vsub.s32 0, %v1714
      %v1716 = vrot.slane %v1711, %v1715
      %v1718 = vsel %vm798, %v1706, 0
      %1720 = vmatprep.subr.mxu0 0.0
      %v1721 = vand.u32 %v1705, 4294901760
      %1722 = vmatpush1.msra.mxu0 %v1721
      %1723 = vmatprep.subr.mxu0 0.0
      %1724 = vmatpush1.msra.mxu0 0.0
      %1725 = vmatprep.subr.mxu0 0.0
      %1726 = vmatpush1.msra.mxu0 0.0
      %1727 = vmatprep.subr.mxu0 0.0
      %1728 = vmatpush1.msra.mxu0 0.0
      %1729 = vmatprep.subr.mxu0 0.0
      %1730 = vmatpush1.msra.mxu0 0.0
      %1731 = vmatprep.subr.mxu0 0.0
      %1732 = vmatpush1.msra.mxu0 0.0
      %1733 = vmatprep.subr.mxu0 0.0
      %1734 = vmatpush1.msra.mxu0 0.0
      %1735 = vmatprep.subr.mxu0 0.0
      %1736 = vmatpush1.msra.mxu0 0.0
      %1737 = vmatprep.subr.mxu0 0.0
      %1738 = vmatpush1.msra.mxu0 0.0
      %1739 = vmatprep.subr.mxu0 0.0
      %1740 = vmatpush1.msra.mxu0 0.0
      %1741 = vmatprep.subr.mxu0 0.0
      %1742 = vmatpush1.msra.mxu0 0.0
      %1743 = vmatprep.subr.mxu0 0.0
      %1744 = vmatpush1.msra.mxu0 0.0
      %1745 = vmatprep.subr.mxu0 0.0
      %1746 = vmatpush1.msra.mxu0 0.0
      %1747 = vmatprep.subr.mxu0 0.0
      %1748 = vmatpush1.msra.mxu0 0.0
      %1749 = vmatprep.subr.mxu0 0.0
      %1750 = vmatpush1.msra.mxu0 0.0
      %1751 = vmatprep.subr.mxu0 0.0
      %1752 = vmatpush1.msra.mxu0 0.0
      %1753 = vmatprep.subr.mxu0 0.0
      %1754 = vmatpush1.msra.mxu0 0.0
      %1755 = vmatprep.subr.mxu0 0.0
      %1756 = vmatpush1.msra.mxu0 0.0
      %1757 = vmatprep.subr.mxu0 0.0
      %1758 = vmatpush1.msra.mxu0 0.0
      %1759 = vmatprep.subr.mxu0 0.0
      %1760 = vmatpush1.msra.mxu0 0.0
      %1761 = vmatprep.subr.mxu0 0.0
      %1762 = vmatpush1.msra.mxu0 0.0
      %1763 = vmatprep.subr.mxu0 0.0
      %1764 = vmatpush1.msra.mxu0 0.0
      %1765 = vmatprep.subr.mxu0 0.0
      %1766 = vmatpush1.msra.mxu0 0.0
      %1767 = vmatprep.subr.mxu0 0.0
      %1768 = vmatpush1.msra.mxu0 0.0
      %1769 = vmatprep.subr.mxu0 0.0
      %1770 = vmatpush1.msra.mxu0 0.0
      %1771 = vmatprep.subr.mxu0 0.0
      %1772 = vmatpush1.msra.mxu0 0.0
      %1773 = vmatprep.subr.mxu0 0.0
      %1774 = vmatpush1.msra.mxu0 0.0
      %1775 = vmatprep.subr.mxu0 0.0
      %1776 = vmatpush1.msra.mxu0 0.0
      %1777 = vmatprep.subr.mxu0 0.0
      %1778 = vmatpush1.msra.mxu0 0.0
      %1779 = vmatprep.subr.mxu0 0.0
      %1780 = vmatpush1.msra.mxu0 0.0
      %1781 = vmatprep.subr.mxu0 0.0
      %1782 = vmatpush1.msra.mxu0 0.0
      %1783 = vmatprep.subr.mxu0 0.0
      %1784 = vmatpush1.msra.mxu0 0.0
      %1785 = vmatprep.mubr.f32.mxu0 0.0
      %v1786 = vand.u32 %v1718, 4294901760
      %v1787 = vsub.f32 %v1718, %v1786
      %v1788 = vand.u32 %v1787, 4294901760
      %v1789 = vsub.f32 %v1787, %v1788
      %v1790 = vand.u32 %v1789, 4294901760
      %1791 = vmatmul.mubr.f32.gmra.mrb[0].mxu0 %v1790
      %v1792 = vpop.f32.mrb[0].mxu0
      %v1793 = vadd.f32 %v1716, %v1792
      %v1794 = vpop.f32.mrb[0].mxu0
      %1795 = vdwg.mxu0
      %1796 = vmatprep.subr.mxu0 0.0
      %v1797 = vand.u32 %v1705, 4294901760
      %v1798 = vsub.f32 %v1705, %v1797
      %v1799 = vand.u32 %v1798, 4294901760
      %v1800 = vsub.f32 %v1798, %v1799
      %v1801 = vand.u32 %v1800, 4294901760
      %1802 = vmatpush1.msra.mxu0 %v1801
      %1803 = vmatprep.subr.mxu0 0.0
      %1804 = vmatpush1.msra.mxu0 0.0
      %1805 = vmatprep.subr.mxu0 0.0
      %1806 = vmatpush1.msra.mxu0 0.0
      %1807 = vmatprep.subr.mxu0 0.0
      %1808 = vmatpush1.msra.mxu0 0.0
      %1809 = vmatprep.subr.mxu0 0.0
      %1810 = vmatpush1.msra.mxu0 0.0
      %1811 = vmatprep.subr.mxu0 0.0
      %1812 = vmatpush1.msra.mxu0 0.0
      %1813 = vmatprep.subr.mxu0 0.0
      %1814 = vmatpush1.msra.mxu0 0.0
      %1815 = vmatprep.subr.mxu0 0.0
      %1816 = vmatpush1.msra.mxu0 0.0
      %1817 = vmatprep.subr.mxu0 0.0
      %1818 = vmatpush1.msra.mxu0 0.0
      %1819 = vmatprep.subr.mxu0 0.0
      %1820 = vmatpush1.msra.mxu0 0.0
      %1821 = vmatprep.subr.mxu0 0.0
      %1822 = vmatpush1.msra.mxu0 0.0
      %1823 = vmatprep.subr.mxu0 0.0
      %1824 = vmatpush1.msra.mxu0 0.0
      %1825 = vmatprep.subr.mxu0 0.0
      %1826 = vmatpush1.msra.mxu0 0.0
      %1827 = vmatprep.subr.mxu0 0.0
      %1828 = vmatpush1.msra.mxu0 0.0
      %1829 = vmatprep.subr.mxu0 0.0
      %1830 = vmatpush1.msra.mxu0 0.0
      %1831 = vmatprep.subr.mxu0 0.0
      %1832 = vmatpush1.msra.mxu0 0.0
      %1833 = vmatprep.subr.mxu0 0.0
      %1834 = vmatpush1.msra.mxu0 0.0
      %1835 = vmatprep.subr.mxu0 0.0
      %1836 = vmatpush1.msra.mxu0 0.0
      %1837 = vmatprep.subr.mxu0 0.0
      %1838 = vmatpush1.msra.mxu0 0.0
      %1839 = vmatprep.subr.mxu0 0.0
      %1840 = vmatpush1.msra.mxu0 0.0
      %1841 = vmatprep.subr.mxu0 0.0
      %1842 = vmatpush1.msra.mxu0 0.0
      %1843 = vmatprep.subr.mxu0 0.0
      %1844 = vmatpush1.msra.mxu0 0.0
      %1845 = vmatprep.subr.mxu0 0.0
      %1846 = vmatpush1.msra.mxu0 0.0
      %1847 = vmatprep.subr.mxu0 0.0
      %1848 = vmatpush1.msra.mxu0 0.0
      %1849 = vmatprep.subr.mxu0 0.0
      %1850 = vmatpush1.msra.mxu0 0.0
      %1851 = vmatprep.subr.mxu0 0.0
      %1852 = vmatpush1.msra.mxu0 0.0
      %1853 = vmatprep.subr.mxu0 0.0
      %1854 = vmatpush1.msra.mxu0 0.0
      %1855 = vmatprep.subr.mxu0 0.0
      %1856 = vmatpush1.msra.mxu0 0.0
      %1857 = vmatprep.subr.mxu0 0.0
      %1858 = vmatpush1.msra.mxu0 0.0
      %1859 = vmatprep.subr.mxu0 0.0
      %1860 = vmatpush1.msra.mxu0 0.0
      %1861 = vmatprep.subr.mxu0 0.0
      %1862 = vmatpush1.msra.mxu0 0.0
      %1863 = vmatprep.subr.mxu0 0.0
      %1864 = vmatpush1.msra.mxu0 0.0
      %1865 = vmatprep.mubr.f32.mxu0 0.0
      %v1866 = vand.u32 %v1718, 4294901760
      %1867 = vmatmul.mubr.f32.gmra.mrb[0].mxu0 %v1866
      %v1868 = vpop.f32.mrb[0].mxu0
      %v1869 = vadd.f32 %v1793, %v1868
      %v1870 = vpop.f32.mrb[0].mxu0
      %1871 = vdwg.mxu0
      %1872 = vmatprep.subr.mxu0 0.0
      %v1873 = vand.u32 %v1705, 4294901760
      %v1874 = vsub.f32 %v1705, %v1873
      %1875 = vmatpush1.msra.mxu0 %v1874
      %1876 = vmatprep.subr.mxu0 0.0
      %1877 = vmatpush1.msra.mxu0 0.0
      %1878 = vmatprep.subr.mxu0 0.0
      %1879 = vmatpush1.msra.mxu0 0.0
      %1880 = vmatprep.subr.mxu0 0.0
      %1881 = vmatpush1.msra.mxu0 0.0
      %1882 = vmatprep.subr.mxu0 0.0
      %1883 = vmatpush1.msra.mxu0 0.0
      %1884 = vmatprep.subr.mxu0 0.0
      %1885 = vmatpush1.msra.mxu0 0.0
      %1886 = vmatprep.subr.mxu0 0.0
      %1887 = vmatpush1.msra.mxu0 0.0
      %1888 = vmatprep.subr.mxu0 0.0
      %1889 = vmatpush1.msra.mxu0 0.0
      %1890 = vmatprep.subr.mxu0 0.0
      %1891 = vmatpush1.msra.mxu0 0.0
      %1892 = vmatprep.subr.mxu0 0.0
      %1893 = vmatpush1.msra.mxu0 0.0
      %1894 = vmatprep.subr.mxu0 0.0
      %1895 = vmatpush1.msra.mxu0 0.0
      %1896 = vmatprep.subr.mxu0 0.0
      %1897 = vmatpush1.msra.mxu0 0.0
      %1898 = vmatprep.subr.mxu0 0.0
      %1899 = vmatpush1.msra.mxu0 0.0
      %1900 = vmatprep.subr.mxu0 0.0
      %1901 = vmatpush1.msra.mxu0 0.0
      %1902 = vmatprep.subr.mxu0 0.0
      %1903 = vmatpush1.msra.mxu0 0.0
      %1904 = vmatprep.subr.mxu0 0.0
      %1905 = vmatpush1.msra.mxu0 0.0
      %1906 = vmatprep.subr.mxu0 0.0
      %1907 = vmatpush1.msra.mxu0 0.0
      %1908 = vmatprep.subr.mxu0 0.0
      %1909 = vmatpush1.msra.mxu0 0.0
      %1910 = vmatprep.subr.mxu0 0.0
      %1911 = vmatpush1.msra.mxu0 0.0
      %1912 = vmatprep.subr.mxu0 0.0
      %1913 = vmatpush1.msra.mxu0 0.0
      %1914 = vmatprep.subr.mxu0 0.0
      %1915 = vmatpush1.msra.mxu0 0.0
      %1916 = vmatprep.subr.mxu0 0.0
      %1917 = vmatpush1.msra.mxu0 0.0
      %1918 = vmatprep.subr.mxu0 0.0
      %1919 = vmatpush1.msra.mxu0 0.0
      %1920 = vmatprep.subr.mxu0 0.0
      %1921 = vmatpush1.msra.mxu0 0.0
      %1922 = vmatprep.subr.mxu0 0.0
      %1923 = vmatpush1.msra.mxu0 0.0
      %1924 = vmatprep.subr.mxu0 0.0
      %1925 = vmatpush1.msra.mxu0 0.0
      %1926 = vmatprep.subr.mxu0 0.0
      %1927 = vmatpush1.msra.mxu0 0.0
      %1928 = vmatprep.subr.mxu0 0.0
      %1929 = vmatpush1.msra.mxu0 0.0
      %1930 = vmatprep.subr.mxu0 0.0
      %1931 = vmatpush1.msra.mxu0 0.0
      %1932 = vmatprep.subr.mxu0 0.0
      %1933 = vmatpush1.msra.mxu0 0.0
      %1934 = vmatprep.subr.mxu0 0.0
      %1935 = vmatpush1.msra.mxu0 0.0
      %1936 = vmatprep.subr.mxu0 0.0
      %1937 = vmatpush1.msra.mxu0 0.0
      %1938 = vmatprep.mubr.f32.mxu0 0.0
      %v1939 = vand.u32 %v1718, 4294901760
      %v1940 = vsub.f32 %v1718, %v1939
      %1941 = vmatmul.mubr.f32.gmra.mrb[0].mxu0 %v1940
      %v1942 = vpop.f32.mrb[0].mxu0
      %v1943 = vadd.f32 %v1869, %v1942
      %v1944 = vpop.f32.mrb[0].mxu0
      %1945 = vdwg.mxu0
      %1946 = vmatprep.subr.mxu0 0.0
      %v1947 = vand.u32 %v1705, 4294901760
      %1948 = vmatpush1.msra.mxu0 %v1947
      %1949 = vmatprep.subr.mxu0 0.0
      %1950 = vmatpush1.msra.mxu0 0.0
      %1951 = vmatprep.subr.mxu0 0.0
      %1952 = vmatpush1.msra.mxu0 0.0
      %1953 = vmatprep.subr.mxu0 0.0
      %1954 = vmatpush1.msra.mxu0 0.0
      %1955 = vmatprep.subr.mxu0 0.0
      %1956 = vmatpush1.msra.mxu0 0.0
      %1957 = vmatprep.subr.mxu0 0.0
      %1958 = vmatpush1.msra.mxu0 0.0
      %1959 = vmatprep.subr.mxu0 0.0
      %1960 = vmatpush1.msra.mxu0 0.0
      %1961 = vmatprep.subr.mxu0 0.0
      %1962 = vmatpush1.msra.mxu0 0.0
      %1963 = vmatprep.subr.mxu0 0.0
      %1964 = vmatpush1.msra.mxu0 0.0
      %1965 = vmatprep.subr.mxu0 0.0
      %1966 = vmatpush1.msra.mxu0 0.0
      %1967 = vmatprep.subr.mxu0 0.0
      %1968 = vmatpush1.msra.mxu0 0.0
      %1969 = vmatprep.subr.mxu0 0.0
      %1970 = vmatpush1.msra.mxu0 0.0
      %1971 = vmatprep.subr.mxu0 0.0
      %1972 = vmatpush1.msra.mxu0 0.0
      %1973 = vmatprep.subr.mxu0 0.0
      %1974 = vmatpush1.msra.mxu0 0.0
      %1975 = vmatprep.subr.mxu0 0.0
      %1976 = vmatpush1.msra.mxu0 0.0
      %1977 = vmatprep.subr.mxu0 0.0
      %1978 = vmatpush1.msra.mxu0 0.0
      %1979 = vmatprep.subr.mxu0 0.0
      %1980 = vmatpush1.msra.mxu0 0.0
      %1981 = vmatprep.subr.mxu0 0.0
      %1982 = vmatpush1.msra.mxu0 0.0
      %1983 = vmatprep.subr.mxu0 0.0
      %1984 = vmatpush1.msra.mxu0 0.0
      %1985 = vmatprep.subr.mxu0 0.0
      %1986 = vmatpush1.msra.mxu0 0.0
      %1987 = vmatprep.subr.mxu0 0.0
      %1988 = vmatpush1.msra.mxu0 0.0
      %1989 = vmatprep.subr.mxu0 0.0
      %1990 = vmatpush1.msra.mxu0 0.0
      %1991 = vmatprep.subr.mxu0 0.0
      %1992 = vmatpush1.msra.mxu0 0.0
      %1993 = vmatprep.subr.mxu0 0.0
      %1994 = vmatpush1.msra.mxu0 0.0
      %1995 = vmatprep.subr.mxu0 0.0
      %1996 = vmatpush1.msra.mxu0 0.0
      %1997 = vmatprep.subr.mxu0 0.0
      %1998 = vmatpush1.msra.mxu0 0.0
      %1999 = vmatprep.subr.mxu0 0.0
      %2000 = vmatpush1.msra.mxu0 0.0
      %2001 = vmatprep.subr.mxu0 0.0
      %2002 = vmatpush1.msra.mxu0 0.0
      %2003 = vmatprep.subr.mxu0 0.0
      %2004 = vmatpush1.msra.mxu0 0.0
      %2005 = vmatprep.subr.mxu0 0.0
      %2006 = vmatpush1.msra.mxu0 0.0
      %2007 = vmatprep.subr.mxu0 0.0
      %2008 = vmatpush1.msra.mxu0 0.0
      %2009 = vmatprep.subr.mxu0 0.0
      %2010 = vmatpush1.msra.mxu0 0.0
      %2011 = vmatprep.mubr.f32.mxu0 0.0
      %v2012 = vand.u32 %v1718, 4294901760
      %v2013 = vsub.f32 %v1718, %v2012
      %v2014 = vand.u32 %v2013, 4294901760
      %2015 = vmatmul.mubr.f32.gmra.mrb[0].mxu0 %v2014
      %v2016 = vpop.f32.mrb[0].mxu0
      %v2017 = vadd.f32 %v1943, %v2016
      %v2018 = vpop.f32.mrb[0].mxu0
      %2019 = vdwg.mxu0
      %2020 = vmatprep.subr.mxu0 0.0
      %v2021 = vand.u32 %v1705, 4294901760
      %v2022 = vsub.f32 %v1705, %v2021
      %v2023 = vand.u32 %v2022, 4294901760
      %2024 = vmatpush1.msra.mxu0 %v2023
      %2025 = vmatprep.subr.mxu0 0.0
      %2026 = vmatpush1.msra.mxu0 0.0
      %2027 = vmatprep.subr.mxu0 0.0
      %2028 = vmatpush1.msra.mxu0 0.0
      %2029 = vmatprep.subr.mxu0 0.0
      %2030 = vmatpush1.msra.mxu0 0.0
      %2031 = vmatprep.subr.mxu0 0.0
      %2032 = vmatpush1.msra.mxu0 0.0
      %2033 = vmatprep.subr.mxu0 0.0
      %2034 = vmatpush1.msra.mxu0 0.0
      %2035 = vmatprep.subr.mxu0 0.0
      %2036 = vmatpush1.msra.mxu0 0.0
      %2037 = vmatprep.subr.mxu0 0.0
      %2038 = vmatpush1.msra.mxu0 0.0
      %2039 = vmatprep.subr.mxu0 0.0
      %2040 = vmatpush1.msra.mxu0 0.0
      %2041 = vmatprep.subr.mxu0 0.0
      %2042 = vmatpush1.msra.mxu0 0.0
      %2043 = vmatprep.subr.mxu0 0.0
      %2044 = vmatpush1.msra.mxu0 0.0
      %2045 = vmatprep.subr.mxu0 0.0
      %2046 = vmatpush1.msra.mxu0 0.0
      %2047 = vmatprep.subr.mxu0 0.0
      %2048 = vmatpush1.msra.mxu0 0.0
      %2049 = vmatprep.subr.mxu0 0.0
      %2050 = vmatpush1.msra.mxu0 0.0
      %2051 = vmatprep.subr.mxu0 0.0
      %2052 = vmatpush1.msra.mxu0 0.0
      %2053 = vmatprep.subr.mxu0 0.0
      %2054 = vmatpush1.msra.mxu0 0.0
      %2055 = vmatprep.subr.mxu0 0.0
      %2056 = vmatpush1.msra.mxu0 0.0
      %2057 = vmatprep.subr.mxu0 0.0
      %2058 = vmatpush1.msra.mxu0 0.0
      %2059 = vmatprep.subr.mxu0 0.0
      %2060 = vmatpush1.msra.mxu0 0.0
      %2061 = vmatprep.subr.mxu0 0.0
      %2062 = vmatpush1.msra.mxu0 0.0
      %2063 = vmatprep.subr.mxu0 0.0
      %2064 = vmatpush1.msra.mxu0 0.0
      %2065 = vmatprep.subr.mxu0 0.0
      %2066 = vmatpush1.msra.mxu0 0.0
      %2067 = vmatprep.subr.mxu0 0.0
      %2068 = vmatpush1.msra.mxu0 0.0
      %2069 = vmatprep.subr.mxu0 0.0
      %2070 = vmatpush1.msra.mxu0 0.0
      %2071 = vmatprep.subr.mxu0 0.0
      %2072 = vmatpush1.msra.mxu0 0.0
      %2073 = vmatprep.subr.mxu0 0.0
      %2074 = vmatpush1.msra.mxu0 0.0
      %2075 = vmatprep.subr.mxu0 0.0
      %2076 = vmatpush1.msra.mxu0 0.0
      %2077 = vmatprep.subr.mxu0 0.0
      %2078 = vmatpush1.msra.mxu0 0.0
      %2079 = vmatprep.subr.mxu0 0.0
      %2080 = vmatpush1.msra.mxu0 0.0
      %2081 = vmatprep.subr.mxu0 0.0
      %2082 = vmatpush1.msra.mxu0 0.0
      %2083 = vmatprep.subr.mxu0 0.0
      %2084 = vmatpush1.msra.mxu0 0.0
      %2085 = vmatprep.subr.mxu0 0.0
      %2086 = vmatpush1.msra.mxu0 0.0
      %2087 = vmatprep.mubr.f32.mxu0 0.0
      %v2088 = vand.u32 %v1718, 4294901760
      %2089 = vmatmul.mubr.f32.gmra.mrb[0].mxu0 %v2088
      %v2090 = vpop.f32.mrb[0].mxu0
      %v2091 = vadd.f32 %v2017, %v2090
      %v2092 = vpop.f32.mrb[0].mxu0
      %2093 = vdwg.mxu0
      %2094 = vmatprep.subr.mxu0 0.0
      %v2095 = vand.u32 %v1705, 4294901760
      %2096 = vmatpush1.msra.mxu0 %v2095
      %2097 = vmatprep.subr.mxu0 0.0
      %2098 = vmatpush1.msra.mxu0 0.0
      %2099 = vmatprep.subr.mxu0 0.0
      %2100 = vmatpush1.msra.mxu0 0.0
      %2101 = vmatprep.subr.mxu0 0.0
      %2102 = vmatpush1.msra.mxu0 0.0
      %2103 = vmatprep.subr.mxu0 0.0
      %2104 = vmatpush1.msra.mxu0 0.0
      %2105 = vmatprep.subr.mxu0 0.0
      %2106 = vmatpush1.msra.mxu0 0.0
      %2107 = vmatprep.subr.mxu0 0.0
      %2108 = vmatpush1.msra.mxu0 0.0
      %2109 = vmatprep.subr.mxu0 0.0
      %2110 = vmatpush1.msra.mxu0 0.0
      %2111 = vmatprep.subr.mxu0 0.0
      %2112 = vmatpush1.msra.mxu0 0.0
      %2113 = vmatprep.subr.mxu0 0.0
      %2114 = vmatpush1.msra.mxu0 0.0
      %2115 = vmatprep.subr.mxu0 0.0
      %2116 = vmatpush1.msra.mxu0 0.0
      %2117 = vmatprep.subr.mxu0 0.0
      %2118 = vmatpush1.msra.mxu0 0.0
      %2119 = vmatprep.subr.mxu0 0.0
      %2120 = vmatpush1.msra.mxu0 0.0
      %2121 = vmatprep.subr.mxu0 0.0
      %2122 = vmatpush1.msra.mxu0 0.0
      %2123 = vmatprep.subr.mxu0 0.0
      %2124 = vmatpush1.msra.mxu0 0.0
      %2125 = vmatprep.subr.mxu0 0.0
      %2126 = vmatpush1.msra.mxu0 0.0
      %2127 = vmatprep.subr.mxu0 0.0
      %2128 = vmatpush1.msra.mxu0 0.0
      %2129 = vmatprep.subr.mxu0 0.0
      %2130 = vmatpush1.msra.mxu0 0.0
      %2131 = vmatprep.subr.mxu0 0.0
      %2132 = vmatpush1.msra.mxu0 0.0
      %2133 = vmatprep.subr.mxu0 0.0
      %2134 = vmatpush1.msra.mxu0 0.0
      %2135 = vmatprep.subr.mxu0 0.0
      %2136 = vmatpush1.msra.mxu0 0.0
      %2137 = vmatprep.subr.mxu0 0.0
      %2138 = vmatpush1.msra.mxu0 0.0
      %2139 = vmatprep.subr.mxu0 0.0
      %2140 = vmatpush1.msra.mxu0 0.0
      %2141 = vmatprep.subr.mxu0 0.0
      %2142 = vmatpush1.msra.mxu0 0.0
      %2143 = vmatprep.subr.mxu0 0.0
      %2144 = vmatpush1.msra.mxu0 0.0
      %2145 = vmatprep.subr.mxu0 0.0
      %2146 = vmatpush1.msra.mxu0 0.0
      %2147 = vmatprep.subr.mxu0 0.0
      %2148 = vmatpush1.msra.mxu0 0.0
      %2149 = vmatprep.subr.mxu0 0.0
      %2150 = vmatpush1.msra.mxu0 0.0
      %2151 = vmatprep.subr.mxu0 0.0
      %2152 = vmatpush1.msra.mxu0 0.0
      %2153 = vmatprep.subr.mxu0 0.0
      %2154 = vmatpush1.msra.mxu0 0.0
      %2155 = vmatprep.subr.mxu0 0.0
      %2156 = vmatpush1.msra.mxu0 0.0
      %2157 = vmatprep.subr.mxu0 0.0
      %2158 = vmatpush1.msra.mxu0 0.0
      %2159 = vmatprep.mubr.f32.mxu0 0.0
      %v2160 = vand.u32 %v1718, 4294901760
      %2161 = vmatmul.mubr.f32.gmra.mrb[0].mxu0 %v2160
      %v2162 = vpop.f32.mrb[0].mxu0
      %v2163 = vadd.f32 %v2091, %v2162
      %v2164 = vpop.f32.mrb[0].mxu0
      %2165 = vdwg.mxu0
      %v2166 = vtanh.pop %v2163
      %v2167 = vmul.f32 %v2166, 0.5
      %v2168 = vadd.f32 %v2167, 0.5
      %2169 = vst [vmem:[%s327] sm:$0x1] %v2168
      %p2170 = scmp.lt.s32.totalorder %s22, 1
      %s2171 = scalar_select %p2170, %s22, 1
      %s2172 = scalar_lea.vmem %s9, %s2171
      // Predicated region
      $region57: #{neural_network_forward.1} parent=55 // pred_check
        %p2173 = pneg %p234
      $region58: #{neural_network_forward.1} parent=55 // pred_check_branch
        %2175 = sbr.rel (%p2173) target = $region60
      $region59: #{neural_network_forward.1} parent=55 // pred_region
        _
      $region60: #{neural_network_forward.1} parent=55 // pred_fallthru
        _
    $region56: #{neural_network_forward.1} parent=5 // pred_fallthru
      _
    %p2176 = scmp.le.s32.totalorder 2, %s17
    // Predicated region
    $region61: #{neural_network_forward.1} parent=5 // pred_check
      %p2177 = pneg %p2176
    $region62: #{neural_network_forward.1} parent=5 // pred_check_branch
      %2179 = sbr.rel (%p2177) target = $region64
    $region63: #{neural_network_forward.1} parent=5 // pred_region
      %s2180 = ssub.s32 %s17, 2
      // Predicated region
      $region65: #{neural_network_forward.1} parent=63 // pred_check
        %p2181 = pneg %p240
      $region66: #{neural_network_forward.1} parent=63 // pred_check_branch
        %2183 = sbr.rel (%p2181) target = $region68
      $region67: #{neural_network_forward.1} parent=63 // pred_region
        %p2184 = scmp.lt.s32.totalorder %s23, 1
        %s2185 = scalar_select %p2184, %s23, 1
        %s2186 = scalar_lea.vmem %s9, %s2185
      $region68: #{neural_network_forward.1} parent=63 // pred_fallthru
        _
    $region64: #{neural_network_forward.1} parent=5 // pred_fallthru
      _
  $region6: #{neural_network_forward.1} parent=0 // loop_footer
    %s21 = sadd.s32 1, %s17
  $region7: #{neural_network_forward.1} parent=0 // loop_footer_branch
    %16 = sbr.rel target = $region3
  $region8: #{neural_network_forward.1} parent=0 // loop_exit
    _

</llo_original>
